<compile_context>
chip_gen: v7x
topology: tpu7x:2x2x1
jax: 0.10.0
libtpu: 0.0.40
codegen_flags: <defaults>
</compile_context>

<pallas_src>
import math

import jax
import jax.numpy as jnp
from jax.experimental import pallas as pl
from jax.experimental.pallas import tpu as pltpu

# ---------------- model dims (small, consistent with the module) -------------
B = 2            # batch
S = 8            # sequence length
D_IN = 32        # in_dimension
D_OUT = 32       # out_dimension (== in_dimension so residual add is valid)
DK = 8           # kq_dimension (per-head q/k size)
H = 4            # num_heads
DV = D_OUT // H  # per-head value size
STRETCH = 2      # linear_stretch
D_FF = STRETCH * D_OUT
HDK = H * DK                    # 32
HDV = H * DV                    # 32
QKV = 2 * HDK + HDV             # 96: fused q|k|v projection width
LN_EPS = 1e-5
LANES = 128

assert D_IN == D_OUT

# weight-slab row offsets (each block padded to 128 lanes)
_R_QKV = 0
_R_WO = _R_QKV + D_IN           # 32
_R_W1 = _R_WO + HDV             # 64
_R_W2 = _R_W1 + D_OUT           # 96
_R_END = _R_W2 + D_FF           # 160


def _layernorm(x, gamma, beta):
    # LayerNorm over last dim, biased variance, eps = 1e-5 (PyTorch default).
    mu = jnp.mean(x, axis=-1, keepdims=True)
    xc = x - mu
    var = jnp.mean(xc * xc, axis=-1, keepdims=True)
    return xc * jax.lax.rsqrt(var + LN_EPS) * gamma + beta


def encoder_layer_kernel(x_ref, w_ref, vec_ref, out_ref):
    # x_ref:   (B*S, D_IN)   activations (batch folded into rows)
    # w_ref:   (160, 128)    packed weight slab (Wqkv | Wo | W1 | W2)
    # vec_ref: (8, 128)      packed bias / LayerNorm slab
    # out_ref: (B*S, D_OUT)
    x = x_ref[...]

    # ---- static slices of the packed parameter slabs (free) ----------------
    w_qkv = w_ref[_R_QKV:_R_WO, 0:QKV]        # (32, 96), q-cols pre-scaled by 1/sqrt(DK)
    w1    = w_ref[_R_W1:_R_W2, 0:D_FF]        # (32, 64)
    w2    = w_ref[_R_W2:_R_END, 0:D_OUT]      # (64, 32)
    b_qkv = vec_ref[0:1, 0:QKV]
    bo    = vec_ref[1:2, 0:D_OUT]
    b1    = vec_ref[2:3, 0:D_FF]
    b2    = vec_ref[3:4, 0:D_OUT]
    g1    = vec_ref[4:5, 0:D_OUT]
    be1   = vec_ref[5:6, 0:D_OUT]
    g2    = vec_ref[6:7, 0:D_OUT]
    be2   = vec_ref[7:8, 0:D_OUT]

    # ---- fused Q/K/V projection over all batch*seq rows (one MXU push) -----
    # 1/sqrt(DK) is folded into the Q weight columns & bias at pack time.
    qkv = jnp.dot(x, w_qkv, preferred_element_type=jnp.float32) + b_qkv  # (B*S, 96)
    q3 = qkv[:, 0:HDK].reshape(B, S, HDK)
    k3 = qkv[:, HDK:2 * HDK].reshape(B, S, HDK)
    v3 = qkv[:, 2 * HDK:QKV].reshape(B, S, HDV)

    # ---- head relayout: lanes -> leading batch dim (h-major, b-minor) ------
    # One relayout instead of a per-head compute loop; done with static lane
    # slices + leading-axis concat (safe Mosaic lowering at these shapes).
    q_bh = jnp.concatenate([q3[:, :, h * DK:(h + 1) * DK] for h in range(H)], axis=0)
    k_bh = jnp.concatenate([k3[:, :, h * DK:(h + 1) * DK] for h in range(H)], axis=0)
    v_bh = jnp.concatenate([v3[:, :, h * DV:(h + 1) * DV] for h in range(H)], axis=0)
    # q_bh/k_bh: (H*B, S, DK), v_bh: (H*B, S, DV)

    # ---- all heads at once: 2 batched MXU pushes + one softmax -------------
    s = jnp.einsum('bqd,bkd->bqk', q_bh, k_bh,
                   preferred_element_type=jnp.float32)          # (H*B, S, S)
    s = s - jnp.max(s, axis=-1, keepdims=True)
    p = jnp.exp(s)
    p = p / jnp.sum(p, axis=-1, keepdims=True)                  # exact divide (review)
    ctx = jnp.einsum('bqk,bkd->bqd', p, v_bh,
                     preferred_element_type=jnp.float32)        # (H*B, S, DV)

    # ---- output projection: per-head accumulation against sublane-aligned --
    # wo row slices (no lane-axis concat of 8-lane head outputs).
    y = jnp.zeros((B * S, D_OUT), jnp.float32)
    for h in range(H):
        ctx_h = ctx[h * B:(h + 1) * B].reshape(B * S, DV)       # leading-dim slice, free
        wo_h = w_ref[_R_WO + h * DV:_R_WO + (h + 1) * DV, 0:D_OUT]  # sublane rows, free
        y = y + jnp.dot(ctx_h, wo_h, preferred_element_type=jnp.float32)
    y = y + bo

    # ---- add & norm 1 (dropout == identity in eval) ------------------------
    y = _layernorm(y + x, g1, be1)

    # ---- feed forward -------------------------------------------------------
    z = jnp.dot(y, w1, preferred_element_type=jnp.float32) + b1
    z = jnp.maximum(z, 0.0)
    z = jnp.dot(z, w2, preferred_element_type=jnp.float32) + b2

    # ---- add & norm 2 -------------------------------------------------------
    z = _layernorm(z + y, g2, be2)

    out_ref[...] = z.astype(out_ref.dtype)


def _pad_cols(a):
    a = a.astype(jnp.float32)
    return jnp.pad(a, ((0, 0), (0, LANES - a.shape[1])))


def pack_params(params):
    """Pack the 16 parameter tensors into two lane-padded VMEM slabs.

    Called ONCE at init (hoisted out of the jitted forward).  The 1/sqrt(DK)
    attention scale is folded into the Q projection weight & bias here.
    """
    (wq, bq, wk, bk, wv, bv, wo, bo, w1, b1, w2, b2, g1, be1, g2, be2) = params
    scale = 1.0 / math.sqrt(DK)
    wq_s, bq_s = wq * scale, bq * scale
    wslab = jnp.concatenate([
        _pad_cols(jnp.concatenate([wq_s, wk, wv], axis=1)),  # rows   0:32  cols 0:96
        _pad_cols(wo),                                       # rows  32:64  cols 0:32
        _pad_cols(w1),                                       # rows  64:96  cols 0:64
        _pad_cols(w2),                                       # rows 96:160  cols 0:32
    ], axis=0)                                               # (160, 128)
    vslab = jnp.concatenate([
        _pad_cols(jnp.concatenate([bq_s, bk, bv], axis=1)),  # row 0: b_qkv
        _pad_cols(bo), _pad_cols(b1), _pad_cols(b2),
        _pad_cols(g1), _pad_cols(be1), _pad_cols(g2), _pad_cols(be2),
    ], axis=0)                                               # (8, 128)
    return wslab, vslab


@jax.jit
def encoder_layer(x, wslab, vslab):
    # Grid-less single invocation: the whole (B,S,D) toy batch is one call.
    # TODO(synk): at realistic sizes add a leading "parallel" grid axis over
    # batch/S-tiles (v7x 2nd TensorCore), bf16 matmul operands, lane-dense output.
    out = pl.pallas_call(
        encoder_layer_kernel,
        out_shape=jax.ShapeDtypeStruct((B * S, D_OUT), x.dtype),
        in_specs=[
            pl.BlockSpec(memory_space=pltpu.MemorySpace.VMEM),
            pl.BlockSpec(memory_space=pltpu.MemorySpace.VMEM),
            pl.BlockSpec(memory_space=pltpu.MemorySpace.VMEM),
        ],
        out_specs=pl.BlockSpec(memory_space=pltpu.MemorySpace.VMEM),
    )(x.reshape(B * S, D_IN), wslab, vslab)
    return out.reshape(B, S, D_OUT)


# ---------------- pure-JAX reference (for correctness check) -----------------
def encoder_layer_ref(x, params):
    (wq, bq, wk, bk, wv, bv, wo, bo, w1, b1, w2, b2, g1, be1, g2, be2) = params
    xf = x.astype(jnp.float32)
    q = xf @ wq + bq
    k = xf @ wk + bk
    v = xf @ wv + bv
    ctx = []
    for h in range(H):
        qh = q[..., h * DK:(h + 1) * DK]
        kh = k[..., h * DK:(h + 1) * DK]
        vh = v[..., h * DV:(h + 1) * DV]
        s = jnp.einsum("bqd,bkd->bqk", qh, kh) / math.sqrt(DK)
        p = jax.nn.softmax(s, axis=-1)
        ctx.append(jnp.einsum("bqk,bkd->bqd", p, vh))
    y = jnp.concatenate(ctx, axis=-1) @ wo + bo
    y = _layernorm(y + xf, g1, be1)
    z = jnp.maximum(y @ w1 + b1, 0.0) @ w2 + b2
    z = _layernorm(z + y, g2, be2)
    return z.astype(x.dtype)


def init_params(key):
    ks = jax.random.split(key, 8)

    def lin(k, fan_in, fan_out):
        lim = 1.0 / math.sqrt(fan_in)
        kw, kb = jax.random.split(k)
        w = jax.random.uniform(kw, (fan_in, fan_out), jnp.float32, -lim, lim)
        b = jax.random.uniform(kb, (1, fan_out), jnp.float32, -lim, lim)
        return w, b

    wq, bq = lin(ks[0], D_IN, HDK)
    wk, bk = lin(ks[1], D_IN, HDK)
    wv, bv = lin(ks[2], D_IN, HDV)
    wo, bo = lin(ks[3], HDV, D_OUT)
    w1, b1 = lin(ks[4], D_OUT, D_FF)
    w2, b2 = lin(ks[5], D_FF, D_OUT)
    g1 = jnp.ones((1, D_OUT), jnp.float32)
    be1 = jnp.zeros((1, D_OUT), jnp.float32)
    g2 = jnp.ones((1, D_OUT), jnp.float32)
    be2 = jnp.zeros((1, D_OUT), jnp.float32)
    return (wq, bq, wk, bk, wv, bv, wo, bo, w1, b1, w2, b2, g1, be1, g2, be2)


if __name__ == "__main__":
    key = jax.random.PRNGKey(0)
    kx, kp = jax.random.split(key)
    x = jax.random.normal(kx, (B, S, D_IN), jnp.float32)
    params = init_params(kp)

    # Pack the parameter slabs ONCE, outside the jitted forward (review item).
    wslab, vslab = pack_params(params)
    wslab, vslab = jax.block_until_ready((wslab, vslab))

    out = encoder_layer(x, wslab, vslab)
    out = jax.block_until_ready(out)

    ref = encoder_layer_ref(x, params)
    assert out.shape == (B, S, D_OUT)
    # Exact softmax normalization again -> tight tolerance restored.
    assert jnp.allclose(out, ref, atol=1e-4, rtol=1e-4)

    print("KERNEL_OK")
</pallas_src>

<mosaic_0001>
module attributes {stable_mosaic.version = 11 : i64} {
  func.func @encoder_layer_kernel(%arg0: memref<16x32xf32, #tpu.memory_space<vmem>>, %arg1: memref<160x128xf32, #tpu.memory_space<vmem>>, %arg2: memref<8x128xf32, #tpu.memory_space<vmem>>, %arg3: memref<16x32xf32, #tpu.memory_space<vmem>>) attributes {dimension_semantics = [], scalar_prefetch = 0 : i64, scratch_operands = 0 : i64, tpu.core_type = #tpu.core_type<tc>} {
    %c0 = arith.constant 0 : index
    %c0_0 = arith.constant 0 : index
    %0 = vector.load %arg0[%c0, %c0_0] : memref<16x32xf32, #tpu.memory_space<vmem>>, vector<16x32xf32>
    %c0_1 = arith.constant 0 : index
    %c0_2 = arith.constant 0 : index
    %1 = vector.load %arg1[%c0_1, %c0_2] : memref<160x128xf32, #tpu.memory_space<vmem>>, vector<32x96xf32>
    %c64 = arith.constant 64 : index
    %c0_3 = arith.constant 0 : index
    %2 = vector.load %arg1[%c64, %c0_3] : memref<160x128xf32, #tpu.memory_space<vmem>>, vector<32x64xf32>
    %c96 = arith.constant 96 : index
    %c0_4 = arith.constant 0 : index
    %3 = vector.load %arg1[%c96, %c0_4] : memref<160x128xf32, #tpu.memory_space<vmem>>, vector<64x32xf32>
    %c0_5 = arith.constant 0 : index
    %c0_6 = arith.constant 0 : index
    %4 = vector.load %arg2[%c0_5, %c0_6] : memref<8x128xf32, #tpu.memory_space<vmem>>, vector<1x96xf32>
    %c1 = arith.constant 1 : index
    %c0_7 = arith.constant 0 : index
    %5 = vector.load %arg2[%c1, %c0_7] : memref<8x128xf32, #tpu.memory_space<vmem>>, vector<1x32xf32>
    %c2 = arith.constant 2 : index
    %c0_8 = arith.constant 0 : index
    %6 = vector.load %arg2[%c2, %c0_8] : memref<8x128xf32, #tpu.memory_space<vmem>>, vector<1x64xf32>
    %c3 = arith.constant 3 : index
    %c0_9 = arith.constant 0 : index
    %7 = vector.load %arg2[%c3, %c0_9] : memref<8x128xf32, #tpu.memory_space<vmem>>, vector<1x32xf32>
    %c4 = arith.constant 4 : index
    %c0_10 = arith.constant 0 : index
    %8 = vector.load %arg2[%c4, %c0_10] : memref<8x128xf32, #tpu.memory_space<vmem>>, vector<1x32xf32>
    %c5 = arith.constant 5 : index
    %c0_11 = arith.constant 0 : index
    %9 = vector.load %arg2[%c5, %c0_11] : memref<8x128xf32, #tpu.memory_space<vmem>>, vector<1x32xf32>
    %c6 = arith.constant 6 : index
    %c0_12 = arith.constant 0 : index
    %10 = vector.load %arg2[%c6, %c0_12] : memref<8x128xf32, #tpu.memory_space<vmem>>, vector<1x32xf32>
    %c7 = arith.constant 7 : index
    %c0_13 = arith.constant 0 : index
    %11 = vector.load %arg2[%c7, %c0_13] : memref<8x128xf32, #tpu.memory_space<vmem>>, vector<1x32xf32>
    %cst = arith.constant dense<0.000000e+00> : vector<16x96xf32>
    %12 = tpu.matmul %0, %1, %cst {dimension_numbers = #tpu.dot_dimension_numbers<[1], [0], [0], [1], [0, 0, 1, 1], [], []>} : vector<16x32xf32>, vector<32x96xf32>, vector<16x96xf32> -> vector<16x96xf32>
    %13 = vector.broadcast %4 : vector<1x96xf32> to vector<16x96xf32>
    %14 = arith.addf %12, %13 : vector<16x96xf32>
    %15 = vector.extract_strided_slice %14 {offsets = [0, 0], sizes = [16, 32], strides = [1, 1]} : vector<16x96xf32> to vector<16x32xf32>
    %16 = vector.shape_cast %15 : vector<16x32xf32> to vector<2x8x32xf32>
    %17 = vector.extract_strided_slice %14 {offsets = [0, 32], sizes = [16, 32], strides = [1, 1]} : vector<16x96xf32> to vector<16x32xf32>
    %18 = vector.shape_cast %17 : vector<16x32xf32> to vector<2x8x32xf32>
    %19 = vector.extract_strided_slice %14 {offsets = [0, 64], sizes = [16, 32], strides = [1, 1]} : vector<16x96xf32> to vector<16x32xf32>
    %20 = vector.shape_cast %19 : vector<16x32xf32> to vector<2x8x32xf32>
    %21 = vector.extract_strided_slice %16 {offsets = [0, 0, 0], sizes = [2, 8, 8], strides = [1, 1, 1]} : vector<2x8x32xf32> to vector<2x8x8xf32>
    %22 = vector.extract_strided_slice %16 {offsets = [0, 0, 8], sizes = [2, 8, 8], strides = [1, 1, 1]} : vector<2x8x32xf32> to vector<2x8x8xf32>
    %23 = vector.extract_strided_slice %16 {offsets = [0, 0, 16], sizes = [2, 8, 8], strides = [1, 1, 1]} : vector<2x8x32xf32> to vector<2x8x8xf32>
    %24 = vector.extract_strided_slice %16 {offsets = [0, 0, 24], sizes = [2, 8, 8], strides = [1, 1, 1]} : vector<2x8x32xf32> to vector<2x8x8xf32>
    %25 = tpu.concatenate %21, %22, %23, %24 in 0 : vector<2x8x8xf32>, vector<2x8x8xf32>, vector<2x8x8xf32>, vector<2x8x8xf32> -> vector<8x8x8xf32>
    %26 = vector.extract_strided_slice %18 {offsets = [0, 0, 0], sizes = [2, 8, 8], strides = [1, 1, 1]} : vector<2x8x32xf32> to vector<2x8x8xf32>
    %27 = vector.extract_strided_slice %18 {offsets = [0, 0, 8], sizes = [2, 8, 8], strides = [1, 1, 1]} : vector<2x8x32xf32> to vector<2x8x8xf32>
    %28 = vector.extract_strided_slice %18 {offsets = [0, 0, 16], sizes = [2, 8, 8], strides = [1, 1, 1]} : vector<2x8x32xf32> to vector<2x8x8xf32>
    %29 = vector.extract_strided_slice %18 {offsets = [0, 0, 24], sizes = [2, 8, 8], strides = [1, 1, 1]} : vector<2x8x32xf32> to vector<2x8x8xf32>
    %30 = tpu.concatenate %26, %27, %28, %29 in 0 : vector<2x8x8xf32>, vector<2x8x8xf32>, vector<2x8x8xf32>, vector<2x8x8xf32> -> vector<8x8x8xf32>
    %31 = vector.extract_strided_slice %20 {offsets = [0, 0, 0], sizes = [2, 8, 8], strides = [1, 1, 1]} : vector<2x8x32xf32> to vector<2x8x8xf32>
    %32 = vector.extract_strided_slice %20 {offsets = [0, 0, 8], sizes = [2, 8, 8], strides = [1, 1, 1]} : vector<2x8x32xf32> to vector<2x8x8xf32>
    %33 = vector.extract_strided_slice %20 {offsets = [0, 0, 16], sizes = [2, 8, 8], strides = [1, 1, 1]} : vector<2x8x32xf32> to vector<2x8x8xf32>
    %34 = vector.extract_strided_slice %20 {offsets = [0, 0, 24], sizes = [2, 8, 8], strides = [1, 1, 1]} : vector<2x8x32xf32> to vector<2x8x8xf32>
    %35 = tpu.concatenate %31, %32, %33, %34 in 0 : vector<2x8x8xf32>, vector<2x8x8xf32>, vector<2x8x8xf32>, vector<2x8x8xf32> -> vector<8x8x8xf32>
    "tpu.trace_start"() <{level = 10 : i32, message = "bqd,bkd->bqk"}> : () -> ()
    %cst_14 = arith.constant dense<0.000000e+00> : vector<8x8x8xf32>
    %36 = tpu.matmul %25, %30, %cst_14 {dimension_numbers = #tpu.dot_dimension_numbers<[2], [2], [1], [1], [0, 0, 0, 1, 1, 1], [0], [0]>} : vector<8x8x8xf32>, vector<8x8x8xf32>, vector<8x8x8xf32> -> vector<8x8x8xf32>
    "tpu.trace_stop"() : () -> ()
    %cst_15 = arith.constant dense<0xFF800000> : vector<8x8xf32>
    %37 = vector.multi_reduction <maximumf>, %36, %cst_15 [2] : vector<8x8x8xf32> to vector<8x8xf32>
    %38 = vector.shape_cast %37 : vector<8x8xf32> to vector<8x8x1xf32>
    %39 = vector.broadcast %38 : vector<8x8x1xf32> to vector<8x8x8xf32>
    %40 = arith.subf %36, %39 : vector<8x8x8xf32>
    %41 = math.exp %40 : vector<8x8x8xf32>
    %cst_16 = arith.constant dense<0.000000e+00> : vector<8x8xf32>
    %42 = vector.multi_reduction <add>, %41, %cst_16 [2] : vector<8x8x8xf32> to vector<8x8xf32>
    %43 = vector.shape_cast %42 : vector<8x8xf32> to vector<8x8x1xf32>
    %44 = vector.broadcast %43 : vector<8x8x1xf32> to vector<8x8x8xf32>
    %45 = arith.divf %41, %44 : vector<8x8x8xf32>
    "tpu.trace_start"() <{level = 10 : i32, message = "bqk,bkd->bqd"}> : () -> ()
    %cst_17 = arith.constant dense<0.000000e+00> : vector<8x8x8xf32>
    %46 = tpu.matmul %45, %35, %cst_17 {dimension_numbers = #tpu.dot_dimension_numbers<[2], [1], [1], [2], [0, 0, 0, 1, 1, 2], [0], [0]>} : vector<8x8x8xf32>, vector<8x8x8xf32>, vector<8x8x8xf32> -> vector<8x8x8xf32>
    %cst_18 = arith.constant 0.000000e+00 : f32
    "tpu.trace_stop"() : () -> ()
    %47 = vector.broadcast %cst_18 : f32 to vector<16x32xf32>
    %48 = vector.extract_strided_slice %46 {offsets = [0, 0, 0], sizes = [2, 8, 8], strides = [1, 1, 1]} : vector<8x8x8xf32> to vector<2x8x8xf32>
    %49 = vector.shape_cast %48 : vector<2x8x8xf32> to vector<16x8xf32>
    %c32 = arith.constant 32 : index
    %c0_19 = arith.constant 0 : index
    %50 = vector.load %arg1[%c32, %c0_19] : memref<160x128xf32, #tpu.memory_space<vmem>>, vector<8x32xf32>
    %cst_20 = arith.constant dense<0.000000e+00> : vector<16x32xf32>
    %51 = tpu.matmul %49, %50, %cst_20 {dimension_numbers = #tpu.dot_dimension_numbers<[1], [0], [0], [1], [0, 0, 1, 1], [], []>} : vector<16x8xf32>, vector<8x32xf32>, vector<16x32xf32> -> vector<16x32xf32>
    %52 = arith.addf %47, %51 : vector<16x32xf32>
    %53 = vector.extract_strided_slice %46 {offsets = [2, 0, 0], sizes = [2, 8, 8], strides = [1, 1, 1]} : vector<8x8x8xf32> to vector<2x8x8xf32>
    %54 = vector.shape_cast %53 : vector<2x8x8xf32> to vector<16x8xf32>
    %c40 = arith.constant 40 : index
    %c0_21 = arith.constant 0 : index
    %55 = vector.load %arg1[%c40, %c0_21] : memref<160x128xf32, #tpu.memory_space<vmem>>, vector<8x32xf32>
    %cst_22 = arith.constant dense<0.000000e+00> : vector<16x32xf32>
    %56 = tpu.matmul %54, %55, %cst_22 {dimension_numbers = #tpu.dot_dimension_numbers<[1], [0], [0], [1], [0, 0, 1, 1], [], []>} : vector<16x8xf32>, vector<8x32xf32>, vector<16x32xf32> -> vector<16x32xf32>
    %57 = arith.addf %52, %56 : vector<16x32xf32>
    %58 = vector.extract_strided_slice %46 {offsets = [4, 0, 0], sizes = [2, 8, 8], strides = [1, 1, 1]} : vector<8x8x8xf32> to vector<2x8x8xf32>
    %59 = vector.shape_cast %58 : vector<2x8x8xf32> to vector<16x8xf32>
    %c48 = arith.constant 48 : index
    %c0_23 = arith.constant 0 : index
    %60 = vector.load %arg1[%c48, %c0_23] : memref<160x128xf32, #tpu.memory_space<vmem>>, vector<8x32xf32>
    %cst_24 = arith.constant dense<0.000000e+00> : vector<16x32xf32>
    %61 = tpu.matmul %59, %60, %cst_24 {dimension_numbers = #tpu.dot_dimension_numbers<[1], [0], [0], [1], [0, 0, 1, 1], [], []>} : vector<16x8xf32>, vector<8x32xf32>, vector<16x32xf32> -> vector<16x32xf32>
    %62 = arith.addf %57, %61 : vector<16x32xf32>
    %63 = vector.extract_strided_slice %46 {offsets = [6, 0, 0], sizes = [2, 8, 8], strides = [1, 1, 1]} : vector<8x8x8xf32> to vector<2x8x8xf32>
    %64 = vector.shape_cast %63 : vector<2x8x8xf32> to vector<16x8xf32>
    %c56 = arith.constant 56 : index
    %c0_25 = arith.constant 0 : index
    %65 = vector.load %arg1[%c56, %c0_25] : memref<160x128xf32, #tpu.memory_space<vmem>>, vector<8x32xf32>
    %cst_26 = arith.constant dense<0.000000e+00> : vector<16x32xf32>
    %66 = tpu.matmul %64, %65, %cst_26 {dimension_numbers = #tpu.dot_dimension_numbers<[1], [0], [0], [1], [0, 0, 1, 1], [], []>} : vector<16x8xf32>, vector<8x32xf32>, vector<16x32xf32> -> vector<16x32xf32>
    %67 = arith.addf %62, %66 : vector<16x32xf32>
    %68 = vector.broadcast %5 : vector<1x32xf32> to vector<16x32xf32>
    %69 = arith.addf %67, %68 : vector<16x32xf32>
    %70 = arith.addf %69, %0 : vector<16x32xf32>
    %cst_27 = arith.constant dense<0.000000e+00> : vector<16xf32>
    %71 = vector.multi_reduction <add>, %70, %cst_27 [1] : vector<16x32xf32> to vector<16xf32>
    %72 = vector.shape_cast %71 : vector<16xf32> to vector<16x1xf32>
    %cst_28 = arith.constant 3.200000e+01 : f32
    %73 = vector.broadcast %cst_28 : f32 to vector<16x1xf32>
    %74 = arith.divf %72, %73 : vector<16x1xf32>
    %75 = vector.broadcast %74 : vector<16x1xf32> to vector<16x32xf32>
    %76 = arith.subf %70, %75 : vector<16x32xf32>
    %77 = arith.mulf %76, %76 : vector<16x32xf32>
    %cst_29 = arith.constant dense<0.000000e+00> : vector<16xf32>
    %78 = vector.multi_reduction <add>, %77, %cst_29 [1] : vector<16x32xf32> to vector<16xf32>
    %79 = vector.shape_cast %78 : vector<16xf32> to vector<16x1xf32>
    %cst_30 = arith.constant 3.200000e+01 : f32
    %80 = vector.broadcast %cst_30 : f32 to vector<16x1xf32>
    %81 = arith.divf %79, %80 : vector<16x1xf32>
    %cst_31 = arith.constant 9.99999974E-6 : f32
    %82 = vector.broadcast %cst_31 : f32 to vector<16x1xf32>
    %83 = arith.addf %81, %82 : vector<16x1xf32>
    %84 = math.rsqrt %83 : vector<16x1xf32>
    %85 = vector.broadcast %84 : vector<16x1xf32> to vector<16x32xf32>
    %86 = arith.mulf %76, %85 : vector<16x32xf32>
    %87 = vector.broadcast %8 : vector<1x32xf32> to vector<16x32xf32>
    %88 = arith.mulf %86, %87 : vector<16x32xf32>
    %89 = vector.broadcast %9 : vector<1x32xf32> to vector<16x32xf32>
    %90 = arith.addf %88, %89 : vector<16x32xf32>
    %cst_32 = arith.constant dense<0.000000e+00> : vector<16x64xf32>
    %91 = tpu.matmul %90, %2, %cst_32 {dimension_numbers = #tpu.dot_dimension_numbers<[1], [0], [0], [1], [0, 0, 1, 1], [], []>} : vector<16x32xf32>, vector<32x64xf32>, vector<16x64xf32> -> vector<16x64xf32>
    %92 = vector.broadcast %6 : vector<1x64xf32> to vector<16x64xf32>
    %93 = arith.addf %91, %92 : vector<16x64xf32>
    %cst_33 = arith.constant 0.000000e+00 : f32
    %94 = vector.broadcast %cst_33 : f32 to vector<16x64xf32>
    %95 = arith.maximumf %93, %94 : vector<16x64xf32>
    %cst_34 = arith.constant dense<0.000000e+00> : vector<16x32xf32>
    %96 = tpu.matmul %95, %3, %cst_34 {dimension_numbers = #tpu.dot_dimension_numbers<[1], [0], [0], [1], [0, 0, 1, 1], [], []>} : vector<16x64xf32>, vector<64x32xf32>, vector<16x32xf32> -> vector<16x32xf32>
    %97 = vector.broadcast %7 : vector<1x32xf32> to vector<16x32xf32>
    %98 = arith.addf %96, %97 : vector<16x32xf32>
    %99 = arith.addf %98, %90 : vector<16x32xf32>
    %cst_35 = arith.constant dense<0.000000e+00> : vector<16xf32>
    %100 = vector.multi_reduction <add>, %99, %cst_35 [1] : vector<16x32xf32> to vector<16xf32>
    %101 = vector.shape_cast %100 : vector<16xf32> to vector<16x1xf32>
    %cst_36 = arith.constant 3.200000e+01 : f32
    %102 = vector.broadcast %cst_36 : f32 to vector<16x1xf32>
    %103 = arith.divf %101, %102 : vector<16x1xf32>
    %104 = vector.broadcast %103 : vector<16x1xf32> to vector<16x32xf32>
    %105 = arith.subf %99, %104 : vector<16x32xf32>
    %106 = arith.mulf %105, %105 : vector<16x32xf32>
    %cst_37 = arith.constant dense<0.000000e+00> : vector<16xf32>
    %107 = vector.multi_reduction <add>, %106, %cst_37 [1] : vector<16x32xf32> to vector<16xf32>
    %108 = vector.shape_cast %107 : vector<16xf32> to vector<16x1xf32>
    %cst_38 = arith.constant 3.200000e+01 : f32
    %109 = vector.broadcast %cst_38 : f32 to vector<16x1xf32>
    %110 = arith.divf %108, %109 : vector<16x1xf32>
    %cst_39 = arith.constant 9.99999974E-6 : f32
    %111 = vector.broadcast %cst_39 : f32 to vector<16x1xf32>
    %112 = arith.addf %110, %111 : vector<16x1xf32>
    %113 = math.rsqrt %112 : vector<16x1xf32>
    %114 = vector.broadcast %113 : vector<16x1xf32> to vector<16x32xf32>
    %115 = arith.mulf %105, %114 : vector<16x32xf32>
    %116 = vector.broadcast %10 : vector<1x32xf32> to vector<16x32xf32>
    %117 = arith.mulf %115, %116 : vector<16x32xf32>
    %118 = vector.broadcast %11 : vector<1x32xf32> to vector<16x32xf32>
    %119 = arith.addf %117, %118 : vector<16x32xf32>
    %c0_40 = arith.constant 0 : index
    %c0_41 = arith.constant 0 : index
    %120 = vector.load %arg3[%c0_40, %c0_41] : memref<16x32xf32, #tpu.memory_space<vmem>>, vector<16x32xf32>
    tpu.vector_store %arg3[%c0_40, %c0_41], %119 {strides = array<i32>} : memref<16x32xf32, #tpu.memory_space<vmem>>, vector<16x32xf32>,
    return
  }
}

</mosaic_0001>

<llo_original>
// kernel: encoder_layer.1
$region0: #{encoder_layer.1}
  #allocation0 [shape = 'u32[]', space=smem, size = 0x4, offset = 0x4, fixed_abs, tag = 'smem constant byte address 0x4 - core index']
  #allocation1 [shape = 'u32[144,128]{1,0:T(1,128)}', space=vmem, size = 0x12000, scoped, tag = 'internal scratch']
  %s0 = inlined_call_operand.hbm [shape: f32[16,32], index: 0, kind: input, shape index: {}]
  %s1 = inlined_call_operand.hbm [shape: f32[160,128], index: 1, kind: input, shape index: {}]
  %s2 = inlined_call_operand.vmem [shape: f32[8,128], index: 2, kind: input, shape index: {}]
  %s3 = inlined_call_operand.hbm [shape: f32[16,32], index: 3, kind: output, shape index: {}]
  %s4 = sld [smem:[#allocation0]]
  $region30: #{encoder_layer.1} parent=0
    _
  %s6 = ssub.s32 1, %s4
  %s7 = scalar_select 0, %s6, %s4
  $region1: #{encoder_layer.1} parent=0
    #allocation2 [shape = 'u8[8192]{0}', space=vmem, size = 0x2000, scoped, tag = 'input window, operand 0, single buffered']
    #allocation3 [shape = 's32[1]{0}', space=sflag, size = 0x4, scoped, tag = 'scoped memory for encoder_layer.1']
    #allocation4 [shape = 's32[1]{0}', space=sflag, size = 0x4, scoped, tag = 'scoped memory for encoder_layer.1']
    #allocation5 [shape = 'u8[81920]{0}', space=vmem, size = 0x14000, scoped, tag = 'input window, operand 1, single buffered']
    #allocation6 [shape = 's32[1]{0}', space=sflag, size = 0x4, scoped, tag = 'scoped memory for encoder_layer.1']
    #allocation7 [shape = 'u8[8192]{0}', space=vmem, size = 0x2000, scoped, tag = 'output window, operand 0, single buffered']
    %8 = vsyncpa [#allocation3], 0
    %9 = vsyncpa [#allocation6], 0
    %10 = vsyncpa [#allocation4], 0
    // Predicated region
    $region2: #{encoder_layer.1} parent=1 // pred_check
      _
    $region3: #{encoder_layer.1} parent=1 // pred_check_branch
      %12 = sbr.rel (0) target = $region5
    $region4: #{encoder_layer.1} parent=1 // pred_region
      %s14 = ssub.s32 256, 256
      %15 = vsyncadd [#allocation3], %s14
      %s16 = sshll.u32 [#allocation2], 4
      %s17 = int_to_ptr.vmem [resolvable:$true] %s16
      %22 = dma.hbm_to_vmem [thread:$0]  %s0, 256, %s17, [#allocation3], 128, 128, 8
    $region5: #{encoder_layer.1} parent=1 // pred_fallthru
      _
    // Predicated region
    $region6: #{encoder_layer.1} parent=1 // pred_check
      _
    $region7: #{encoder_layer.1} parent=1 // pred_check_branch
      %24 = sbr.rel (0) target = $region9
    $region8: #{encoder_layer.1} parent=1 // pred_region
      %s26 = ssub.s32 2560, 2560
      %27 = vsyncadd [#allocation6], %s26
      %s28 = sshll.u32 [#allocation5], 4
      %s29 = int_to_ptr.vmem [resolvable:$true] %s28
      %34 = dma.hbm_to_vmem [thread:$0]  %s1, 2560, %s29, [#allocation6], 128, 128, 8
    $region9: #{encoder_layer.1} parent=1 // pred_fallthru
      _
    // Predicated region
    $region10: #{encoder_layer.1} parent=1 // pred_check
      _
    $region11: #{encoder_layer.1} parent=1 // pred_check_branch
      %36 = sbr.rel (0) target = $region13
    $region12: #{encoder_layer.1} parent=1 // pred_region
      _
    $region13: #{encoder_layer.1} parent=1 // pred_fallthru
      _
    // Predicated region
    $region14: #{encoder_layer.1} parent=1 // pred_check
      _
    $region15: #{encoder_layer.1} parent=1 // pred_check_branch
      %38 = sbr.rel (0) target = $region17
    $region16: #{encoder_layer.1} parent=1 // pred_region
      %39 = dma.done [#allocation3], 256
    $region17: #{encoder_layer.1} parent=1 // pred_fallthru
      _
    // Predicated region
    $region18: #{encoder_layer.1} parent=1 // pred_check
      _
    $region19: #{encoder_layer.1} parent=1 // pred_check_branch
      %41 = sbr.rel (0) target = $region21
    $region20: #{encoder_layer.1} parent=1 // pred_region
      %42 = dma.done [#allocation6], 2560
    $region21: #{encoder_layer.1} parent=1 // pred_fallthru
      _
    %v43 = vld [vmem:[#allocation2] sm:$0xff]
    %v44 = vld [vmem:[#allocation2 + $0x8] sm:$0xff]
    %v45 = vld [vmem:[#allocation5] sm:$0xff]
    %v46 = vld [vmem:[#allocation5 + $0x8] sm:$0xff]
    %v47 = vld [vmem:[#allocation5 + $0x10] sm:$0xff]
    %v48 = vld [vmem:[#allocation5 + $0x18] sm:$0xff]
    %v49 = vld [vmem:[#allocation5 + $0x40] sm:$0xff]
    %v50 = vld [vmem:[#allocation5 + $0x48] sm:$0xff]
    %v51 = vld [vmem:[#allocation5 + $0x50] sm:$0xff]
    %v52 = vld [vmem:[#allocation5 + $0x58] sm:$0xff]
    %v53 = vld [vmem:[#allocation5 + $0x60] sm:$0xff]
    %v54 = vld [vmem:[#allocation5 + $0x68] sm:$0xff]
    %v55 = vld [vmem:[#allocation5 + $0x70] sm:$0xff]
    %v56 = vld [vmem:[#allocation5 + $0x78] sm:$0xff]
    %v57 = vld [vmem:[#allocation5 + $0x80] sm:$0xff]
    %v58 = vld [vmem:[#allocation5 + $0x88] sm:$0xff]
    %v59 = vld [vmem:[#allocation5 + $0x90] sm:$0xff]
    %v60 = vld [vmem:[#allocation5 + $0x98] sm:$0xff]
    %v61 = vld [vmem:[%s2] sm:$0x1]
    %v62 = vld [vmem:[%s2 + $0x1] sm:$0x1]
    %v63 = vld [vmem:[%s2 + $0x2] sm:$0x1]
    %v64 = vld [vmem:[%s2 + $0x3] sm:$0x1]
    %v65 = vld [vmem:[%s2 + $0x4] sm:$0x1]
    %v66 = vld [vmem:[%s2 + $0x5] sm:$0x1]
    %v67 = vld [vmem:[%s2 + $0x6] sm:$0x1]
    %v68 = vld [vmem:[%s2 + $0x7] sm:$0x1]
    %v69 = vlaneseq
    %v70 = vshrl.u32 %v69, 7
    %v71 = vsub.s32 0, %v70
    %v72 = vrot.slane %v61, %v71
    %vm73 = vcmask 261120
    %v75 = vsel %vm73, %v43, 0
    %v78 = vsel %vm73, %v44, 0
    %80 = vmatprep.subr.mxu0 0.0
    %81 = vmatpush1.msra.mxu0 %v45
    %82 = vmatprep.subr.mxu0 0.0
    %83 = vmatpush1.msra.mxu0 %v46
    %84 = vmatprep.subr.mxu0 0.0
    %85 = vmatpush1.msra.mxu0 %v47
    %86 = vmatprep.subr.mxu0 0.0
    %87 = vmatpush1.msra.mxu0 %v48
    %88 = vmatprep.subr.mxu0 0.0
    %89 = vmatpush1.msra.mxu0 0.0
    %90 = vmatprep.subr.mxu0 0.0
    %91 = vmatpush1.msra.mxu0 0.0
    %92 = vmatprep.subr.mxu0 0.0
    %93 = vmatpush1.msra.mxu0 0.0
    %94 = vmatprep.subr.mxu0 0.0
    %95 = vmatpush1.msra.mxu0 0.0
    %96 = vmatprep.subr.mxu0 0.0
    %97 = vmatpush1.msra.mxu0 0.0
    %98 = vmatprep.subr.mxu0 0.0
    %99 = vmatpush1.msra.mxu0 0.0
    %100 = vmatprep.subr.mxu0 0.0
    %101 = vmatpush1.msra.mxu0 0.0
    %102 = vmatprep.subr.mxu0 0.0
    %103 = vmatpush1.msra.mxu0 0.0
    %104 = vmatprep.subr.mxu0 0.0
    %105 = vmatpush1.msra.mxu0 0.0
    %106 = vmatprep.subr.mxu0 0.0
    %107 = vmatpush1.msra.mxu0 0.0
    %108 = vmatprep.subr.mxu0 0.0
    %109 = vmatpush1.msra.mxu0 0.0
    %110 = vmatprep.subr.mxu0 0.0
    %111 = vmatpush1.msra.mxu0 0.0
    %112 = vmatprep.subr.mxu0 0.0
    %113 = vmatpush1.msra.mxu0 0.0
    %114 = vmatprep.subr.mxu0 0.0
    %115 = vmatpush1.msra.mxu0 0.0
    %116 = vmatprep.subr.mxu0 0.0
    %117 = vmatpush1.msra.mxu0 0.0
    %118 = vmatprep.subr.mxu0 0.0
    %119 = vmatpush1.msra.mxu0 0.0
    %120 = vmatprep.subr.mxu0 0.0
    %121 = vmatpush1.msra.mxu0 0.0
    %122 = vmatprep.subr.mxu0 0.0
    %123 = vmatpush1.msra.mxu0 0.0
    %124 = vmatprep.subr.mxu0 0.0
    %125 = vmatpush1.msra.mxu0 0.0
    %126 = vmatprep.subr.mxu0 0.0
    %127 = vmatpush1.msra.mxu0 0.0
    %128 = vmatprep.subr.mxu0 0.0
    %129 = vmatpush1.msra.mxu0 0.0
    %130 = vmatprep.subr.mxu0 0.0
    %131 = vmatpush1.msra.mxu0 0.0
    %132 = vmatprep.subr.mxu0 0.0
    %133 = vmatpush1.msra.mxu0 0.0
    %134 = vmatprep.subr.mxu0 0.0
    %135 = vmatpush1.msra.mxu0 0.0
    %136 = vmatprep.subr.mxu0 0.0
    %137 = vmatpush1.msra.mxu0 0.0
    %138 = vmatprep.subr.mxu0 0.0
    %139 = vmatpush1.msra.mxu0 0.0
    %140 = vmatprep.subr.mxu0 0.0
    %141 = vmatpush1.msra.mxu0 0.0
    %142 = vmatprep.subr.mxu0 0.0
    %143 = vmatpush1.msra.mxu0 0.0
    %144 = vmatprep.mubr.f32.mxu0 0.0
    %145 = vmatmul.mubr.f32.gmra.mrb[0].mxu0 %v75
    %v146 = vpop.f32.mrb[0].mxu0
    %v147 = vadd.f32 %v72, %v146
    %v148 = vpop.f32.mrb[0].mxu0
    %149 = vmatprep.mubr.f32.mxu0 0.0
    %150 = vmatmul.mubr.f32.gmra.mrb[0].mxu0 %v78
    %v151 = vpop.f32.mrb[0].mxu0
    %v152 = vadd.f32 %v72, %v151
    %v153 = vpop.f32.mrb[0].mxu0
    %154 = vdwg.mxu0
    %157 = vrot.lane.b32.xlu0 %v147, 120
    %v158 = vpop.permute.xlu0 %157
    %159 = vrot.lane.b32.xlu0 %v152, 120
    %v160 = vpop.permute.xlu0 %159
    %161 = vrot.lane.b32.xlu0 %v147, 112
    %v162 = vpop.permute.xlu0 %161
    %163 = vrot.lane.b32.xlu0 %v152, 112
    %v164 = vpop.permute.xlu0 %163
    %165 = vrot.lane.b32.xlu0 %v147, 104
    %v166 = vpop.permute.xlu0 %165
    %167 = vrot.lane.b32.xlu0 %v152, 104
    %v168 = vpop.permute.xlu0 %167
    %169 = vrot.lane.b32.xlu0 %v147, 96
    %v170 = vpop.permute.xlu0 %169
    %vm171 = vcmask 64512
    %v172 = vsel %vm171, %v147, 0
    %v174 = vsel %vm171, %v170, 0
    %176 = vmatprep.subr.mxu0 0.0
    %177 = vmatpush1.xpose.msra.mxu0 %v174
    %178 = vmatprep.subr.mxu0 0.0
    %179 = vmatpush1.xpose.msra.mxu0 0.0
    %180 = vmatprep.subr.mxu0 0.0
    %181 = vmatpush1.xpose.msra.mxu0 0.0
    %182 = vmatprep.subr.mxu0 0.0
    %183 = vmatpush1.xpose.msra.mxu0 0.0
    %184 = vmatprep.subr.mxu0 0.0
    %185 = vmatpush1.xpose.msra.mxu0 0.0
    %186 = vmatprep.subr.mxu0 0.0
    %187 = vmatpush1.xpose.msra.mxu0 0.0
    %188 = vmatprep.subr.mxu0 0.0
    %189 = vmatpush1.xpose.msra.mxu0 0.0
    %190 = vmatprep.subr.mxu0 0.0
    %191 = vmatpush1.xpose.msra.mxu0 0.0
    %192 = vmatprep.subr.mxu0 0.0
    %193 = vmatpush1.xpose.msra.mxu0 0.0
    %194 = vmatprep.subr.mxu0 0.0
    %195 = vmatpush1.xpose.msra.mxu0 0.0
    %196 = vmatprep.subr.mxu0 0.0
    %197 = vmatpush1.xpose.msra.mxu0 0.0
    %198 = vmatprep.subr.mxu0 0.0
    %199 = vmatpush1.xpose.msra.mxu0 0.0
    %200 = vmatprep.subr.mxu0 0.0
    %201 = vmatpush1.xpose.msra.mxu0 0.0
    %202 = vmatprep.subr.mxu0 0.0
    %203 = vmatpush1.xpose.msra.mxu0 0.0
    %204 = vmatprep.subr.mxu0 0.0
    %205 = vmatpush1.xpose.msra.mxu0 0.0
    %206 = vmatprep.subr.mxu0 0.0
    %207 = vmatpush1.xpose.msra.mxu0 0.0
    %208 = vmatprep.subr.mxu0 0.0
    %209 = vmatpush1.xpose.msra.mxu0 0.0
    %210 = vmatprep.subr.mxu0 0.0
    %211 = vmatpush1.xpose.msra.mxu0 0.0
    %212 = vmatprep.subr.mxu0 0.0
    %213 = vmatpush1.xpose.msra.mxu0 0.0
    %214 = vmatprep.subr.mxu0 0.0
    %215 = vmatpush1.xpose.msra.mxu0 0.0
    %216 = vmatprep.subr.mxu0 0.0
    %217 = vmatpush1.xpose.msra.mxu0 0.0
    %218 = vmatprep.subr.mxu0 0.0
    %219 = vmatpush1.xpose.msra.mxu0 0.0
    %220 = vmatprep.subr.mxu0 0.0
    %221 = vmatpush1.xpose.msra.mxu0 0.0
    %222 = vmatprep.subr.mxu0 0.0
    %223 = vmatpush1.xpose.msra.mxu0 0.0
    %224 = vmatprep.subr.mxu0 0.0
    %225 = vmatpush1.xpose.msra.mxu0 0.0
    %226 = vmatprep.subr.mxu0 0.0
    %227 = vmatpush1.xpose.msra.mxu0 0.0
    %228 = vmatprep.subr.mxu0 0.0
    %229 = vmatpush1.xpose.msra.mxu0 0.0
    %230 = vmatprep.subr.mxu0 0.0
    %231 = vmatpush1.xpose.msra.mxu0 0.0
    %232 = vmatprep.subr.mxu0 0.0
    %233 = vmatpush1.xpose.msra.mxu0 0.0
    %234 = vmatprep.subr.mxu0 0.0
    %235 = vmatpush1.xpose.msra.mxu0 0.0
    %236 = vmatprep.subr.mxu0 0.0
    %237 = vmatpush1.xpose.msra.mxu0 0.0
    %238 = vmatprep.subr.mxu0 0.0
    %239 = vmatpush1.xpose.msra.mxu0 0.0
    %240 = vmatprep.mubr.f32.mxu0 0.0
    %241 = vmatmul.mubr.f32.gmra.mrb[0].mxu0 %v172
    %v242 = vpop.f32.mrb[0].mxu0
    %v243 = vadd.f32 0.0, %v242
    %v244 = vpop.f32.mrb[0].mxu0
    %245 = vdwg.mxu0
    %246 = vrot.lane.b32.xlu0 %v152, 96
    %v247 = vpop.permute.xlu0 %246
    %v248 = vsel %vm171, %v152, 0
    %v250 = vsel %vm171, %v247, 0
    %252 = vmatprep.subr.mxu0 0.0
    %253 = vmatpush1.xpose.msra.mxu0 %v250
    %254 = vmatprep.subr.mxu0 0.0
    %255 = vmatpush1.xpose.msra.mxu0 0.0
    %256 = vmatprep.subr.mxu0 0.0
    %257 = vmatpush1.xpose.msra.mxu0 0.0
    %258 = vmatprep.subr.mxu0 0.0
    %259 = vmatpush1.xpose.msra.mxu0 0.0
    %260 = vmatprep.subr.mxu0 0.0
    %261 = vmatpush1.xpose.msra.mxu0 0.0
    %262 = vmatprep.subr.mxu0 0.0
    %263 = vmatpush1.xpose.msra.mxu0 0.0
    %264 = vmatprep.subr.mxu0 0.0
    %265 = vmatpush1.xpose.msra.mxu0 0.0
    %266 = vmatprep.subr.mxu0 0.0
    %267 = vmatpush1.xpose.msra.mxu0 0.0
    %268 = vmatprep.subr.mxu0 0.0
    %269 = vmatpush1.xpose.msra.mxu0 0.0
    %270 = vmatprep.subr.mxu0 0.0
    %271 = vmatpush1.xpose.msra.mxu0 0.0
    %272 = vmatprep.subr.mxu0 0.0
    %273 = vmatpush1.xpose.msra.mxu0 0.0
    %274 = vmatprep.subr.mxu0 0.0
    %275 = vmatpush1.xpose.msra.mxu0 0.0
    %276 = vmatprep.subr.mxu0 0.0
    %277 = vmatpush1.xpose.msra.mxu0 0.0
    %278 = vmatprep.subr.mxu0 0.0
    %279 = vmatpush1.xpose.msra.mxu0 0.0
    %280 = vmatprep.subr.mxu0 0.0
    %281 = vmatpush1.xpose.msra.mxu0 0.0
    %282 = vmatprep.subr.mxu0 0.0
    %283 = vmatpush1.xpose.msra.mxu0 0.0
    %284 = vmatprep.subr.mxu0 0.0
    %285 = vmatpush1.xpose.msra.mxu0 0.0
    %286 = vmatprep.subr.mxu0 0.0
    %287 = vmatpush1.xpose.msra.mxu0 0.0
    %288 = vmatprep.subr.mxu0 0.0
    %289 = vmatpush1.xpose.msra.mxu0 0.0
    %290 = vmatprep.subr.mxu0 0.0
    %291 = vmatpush1.xpose.msra.mxu0 0.0
    %292 = vmatprep.subr.mxu0 0.0
    %293 = vmatpush1.xpose.msra.mxu0 0.0
    %294 = vmatprep.subr.mxu0 0.0
    %295 = vmatpush1.xpose.msra.mxu0 0.0
    %296 = vmatprep.subr.mxu0 0.0
    %297 = vmatpush1.xpose.msra.mxu0 0.0
    %298 = vmatprep.subr.mxu0 0.0
    %299 = vmatpush1.xpose.msra.mxu0 0.0
    %300 = vmatprep.subr.mxu0 0.0
    %301 = vmatpush1.xpose.msra.mxu0 0.0
    %302 = vmatprep.subr.mxu0 0.0
    %303 = vmatpush1.xpose.msra.mxu0 0.0
    %304 = vmatprep.subr.mxu0 0.0
    %305 = vmatpush1.xpose.msra.mxu0 0.0
    %306 = vmatprep.subr.mxu0 0.0
    %307 = vmatpush1.xpose.msra.mxu0 0.0
    %308 = vmatprep.subr.mxu0 0.0
    %309 = vmatpush1.xpose.msra.mxu0 0.0
    %310 = vmatprep.subr.mxu0 0.0
    %311 = vmatpush1.xpose.msra.mxu0 0.0
    %312 = vmatprep.subr.mxu0 0.0
    %313 = vmatpush1.xpose.msra.mxu0 0.0
    %314 = vmatprep.subr.mxu0 0.0
    %315 = vmatpush1.xpose.msra.mxu0 0.0
    %316 = vmatprep.mubr.f32.mxu0 0.0
    %317 = vmatmul.mubr.f32.gmra.mrb[0].mxu0 %v248
    %v318 = vpop.f32.mrb[0].mxu0
    %v319 = vadd.f32 0.0, %v318
    %v320 = vpop.f32.mrb[0].mxu0
    %321 = vdwg.mxu0
    %322 = vrot.lane.b32.xlu0 %v158, 96
    %v323 = vpop.permute.xlu0 %322
    %v324 = vsel %vm171, %v158, 0
    %v326 = vsel %vm171, %v323, 0
    %328 = vmatprep.subr.mxu0 0.0
    %329 = vmatpush1.xpose.msra.mxu0 %v326
    %330 = vmatprep.subr.mxu0 0.0
    %331 = vmatpush1.xpose.msra.mxu0 0.0
    %332 = vmatprep.subr.mxu0 0.0
    %333 = vmatpush1.xpose.msra.mxu0 0.0
    %334 = vmatprep.subr.mxu0 0.0
    %335 = vmatpush1.xpose.msra.mxu0 0.0
    %336 = vmatprep.subr.mxu0 0.0
    %337 = vmatpush1.xpose.msra.mxu0 0.0
    %338 = vmatprep.subr.mxu0 0.0
    %339 = vmatpush1.xpose.msra.mxu0 0.0
    %340 = vmatprep.subr.mxu0 0.0
    %341 = vmatpush1.xpose.msra.mxu0 0.0
    %342 = vmatprep.subr.mxu0 0.0
    %343 = vmatpush1.xpose.msra.mxu0 0.0
    %344 = vmatprep.subr.mxu0 0.0
    %345 = vmatpush1.xpose.msra.mxu0 0.0
    %346 = vmatprep.subr.mxu0 0.0
    %347 = vmatpush1.xpose.msra.mxu0 0.0
    %348 = vmatprep.subr.mxu0 0.0
    %349 = vmatpush1.xpose.msra.mxu0 0.0
    %350 = vmatprep.subr.mxu0 0.0
    %351 = vmatpush1.xpose.msra.mxu0 0.0
    %352 = vmatprep.subr.mxu0 0.0
    %353 = vmatpush1.xpose.msra.mxu0 0.0
    %354 = vmatprep.subr.mxu0 0.0
    %355 = vmatpush1.xpose.msra.mxu0 0.0
    %356 = vmatprep.subr.mxu0 0.0
    %357 = vmatpush1.xpose.msra.mxu0 0.0
    %358 = vmatprep.subr.mxu0 0.0
    %359 = vmatpush1.xpose.msra.mxu0 0.0
    %360 = vmatprep.subr.mxu0 0.0
    %361 = vmatpush1.xpose.msra.mxu0 0.0
    %362 = vmatprep.subr.mxu0 0.0
    %363 = vmatpush1.xpose.msra.mxu0 0.0
    %364 = vmatprep.subr.mxu0 0.0
    %365 = vmatpush1.xpose.msra.mxu0 0.0
    %366 = vmatprep.subr.mxu0 0.0
    %367 = vmatpush1.xpose.msra.mxu0 0.0
    %368 = vmatprep.subr.mxu0 0.0
    %369 = vmatpush1.xpose.msra.mxu0 0.0
    %370 = vmatprep.subr.mxu0 0.0
    %371 = vmatpush1.xpose.msra.mxu0 0.0
    %372 = vmatprep.subr.mxu0 0.0
    %373 = vmatpush1.xpose.msra.mxu0 0.0
    %374 = vmatprep.subr.mxu0 0.0
    %375 = vmatpush1.xpose.msra.mxu0 0.0
    %376 = vmatprep.subr.mxu0 0.0
    %377 = vmatpush1.xpose.msra.mxu0 0.0
    %378 = vmatprep.subr.mxu0 0.0
    %379 = vmatpush1.xpose.msra.mxu0 0.0
    %380 = vmatprep.subr.mxu0 0.0
    %381 = vmatpush1.xpose.msra.mxu0 0.0
    %382 = vmatprep.subr.mxu0 0.0
    %383 = vmatpush1.xpose.msra.mxu0 0.0
    %384 = vmatprep.subr.mxu0 0.0
    %385 = vmatpush1.xpose.msra.mxu0 0.0
    %386 = vmatprep.subr.mxu0 0.0
    %387 = vmatpush1.xpose.msra.mxu0 0.0
    %388 = vmatprep.subr.mxu0 0.0
    %389 = vmatpush1.xpose.msra.mxu0 0.0
    %390 = vmatprep.subr.mxu0 0.0
    %391 = vmatpush1.xpose.msra.mxu0 0.0
    %392 = vmatprep.mubr.f32.mxu0 0.0
    %393 = vmatmul.mubr.f32.gmra.mrb[0].mxu0 %v324
    %v394 = vpop.f32.mrb[0].mxu0
    %v395 = vadd.f32 0.0, %v394
    %v396 = vpop.f32.mrb[0].mxu0
    %397 = vdwg.mxu0
    %398 = vrot.lane.b32.xlu0 %v160, 96
    %v399 = vpop.permute.xlu0 %398
    %v400 = vsel %vm171, %v160, 0
    %v402 = vsel %vm171, %v399, 0
    %404 = vmatprep.subr.mxu0 0.0
    %405 = vmatpush1.xpose.msra.mxu0 %v402
    %406 = vmatprep.subr.mxu0 0.0
    %407 = vmatpush1.xpose.msra.mxu0 0.0
    %408 = vmatprep.subr.mxu0 0.0
    %409 = vmatpush1.xpose.msra.mxu0 0.0
    %410 = vmatprep.subr.mxu0 0.0
    %411 = vmatpush1.xpose.msra.mxu0 0.0
    %412 = vmatprep.subr.mxu0 0.0
    %413 = vmatpush1.xpose.msra.mxu0 0.0
    %414 = vmatprep.subr.mxu0 0.0
    %415 = vmatpush1.xpose.msra.mxu0 0.0
    %416 = vmatprep.subr.mxu0 0.0
    %417 = vmatpush1.xpose.msra.mxu0 0.0
    %418 = vmatprep.subr.mxu0 0.0
    %419 = vmatpush1.xpose.msra.mxu0 0.0
    %420 = vmatprep.subr.mxu0 0.0
    %421 = vmatpush1.xpose.msra.mxu0 0.0
    %422 = vmatprep.subr.mxu0 0.0
    %423 = vmatpush1.xpose.msra.mxu0 0.0
    %424 = vmatprep.subr.mxu0 0.0
    %425 = vmatpush1.xpose.msra.mxu0 0.0
    %426 = vmatprep.subr.mxu0 0.0
    %427 = vmatpush1.xpose.msra.mxu0 0.0
    %428 = vmatprep.subr.mxu0 0.0
    %429 = vmatpush1.xpose.msra.mxu0 0.0
    %430 = vmatprep.subr.mxu0 0.0
    %431 = vmatpush1.xpose.msra.mxu0 0.0
    %432 = vmatprep.subr.mxu0 0.0
    %433 = vmatpush1.xpose.msra.mxu0 0.0
    %434 = vmatprep.subr.mxu0 0.0
    %435 = vmatpush1.xpose.msra.mxu0 0.0
    %436 = vmatprep.subr.mxu0 0.0
    %437 = vmatpush1.xpose.msra.mxu0 0.0
    %438 = vmatprep.subr.mxu0 0.0
    %439 = vmatpush1.xpose.msra.mxu0 0.0
    %440 = vmatprep.subr.mxu0 0.0
    %441 = vmatpush1.xpose.msra.mxu0 0.0
    %442 = vmatprep.subr.mxu0 0.0
    %443 = vmatpush1.xpose.msra.mxu0 0.0
    %444 = vmatprep.subr.mxu0 0.0
    %445 = vmatpush1.xpose.msra.mxu0 0.0
    %446 = vmatprep.subr.mxu0 0.0
    %447 = vmatpush1.xpose.msra.mxu0 0.0
    %448 = vmatprep.subr.mxu0 0.0
    %449 = vmatpush1.xpose.msra.mxu0 0.0
    %450 = vmatprep.subr.mxu0 0.0
    %451 = vmatpush1.xpose.msra.mxu0 0.0
    %452 = vmatprep.subr.mxu0 0.0
    %453 = vmatpush1.xpose.msra.mxu0 0.0
    %454 = vmatprep.subr.mxu0 0.0
    %455 = vmatpush1.xpose.msra.mxu0 0.0
    %456 = vmatprep.subr.mxu0 0.0
    %457 = vmatpush1.xpose.msra.mxu0 0.0
    %458 = vmatprep.subr.mxu0 0.0
    %459 = vmatpush1.xpose.msra.mxu0 0.0
    %460 = vmatprep.subr.mxu0 0.0
    %461 = vmatpush1.xpose.msra.mxu0 0.0
    %462 = vmatprep.subr.mxu0 0.0
    %463 = vmatpush1.xpose.msra.mxu0 0.0
    %464 = vmatprep.subr.mxu0 0.0
    %465 = vmatpush1.xpose.msra.mxu0 0.0
    %466 = vmatprep.subr.mxu0 0.0
    %467 = vmatpush1.xpose.msra.mxu0 0.0
    %468 = vmatprep.mubr.f32.mxu0 0.0
    %469 = vmatmul.mubr.f32.gmra.mrb[0].mxu0 %v400
    %v470 = vpop.f32.mrb[0].mxu0
    %v471 = vadd.f32 0.0, %v470
    %v472 = vpop.f32.mrb[0].mxu0
    %473 = vdwg.mxu0
    %474 = vrot.lane.b32.xlu0 %v162, 96
    %v475 = vpop.permute.xlu0 %474
    %v476 = vsel %vm171, %v162, 0
    %v478 = vsel %vm171, %v475, 0
    %480 = vmatprep.subr.mxu0 0.0
    %481 = vmatpush1.xpose.msra.mxu0 %v478
    %482 = vmatprep.subr.mxu0 0.0
    %483 = vmatpush1.xpose.msra.mxu0 0.0
    %484 = vmatprep.subr.mxu0 0.0
    %485 = vmatpush1.xpose.msra.mxu0 0.0
    %486 = vmatprep.subr.mxu0 0.0
    %487 = vmatpush1.xpose.msra.mxu0 0.0
    %488 = vmatprep.subr.mxu0 0.0
    %489 = vmatpush1.xpose.msra.mxu0 0.0
    %490 = vmatprep.subr.mxu0 0.0
    %491 = vmatpush1.xpose.msra.mxu0 0.0
    %492 = vmatprep.subr.mxu0 0.0
    %493 = vmatpush1.xpose.msra.mxu0 0.0
    %494 = vmatprep.subr.mxu0 0.0
    %495 = vmatpush1.xpose.msra.mxu0 0.0
    %496 = vmatprep.subr.mxu0 0.0
    %497 = vmatpush1.xpose.msra.mxu0 0.0
    %498 = vmatprep.subr.mxu0 0.0
    %499 = vmatpush1.xpose.msra.mxu0 0.0
    %500 = vmatprep.subr.mxu0 0.0
    %501 = vmatpush1.xpose.msra.mxu0 0.0
    %502 = vmatprep.subr.mxu0 0.0
    %503 = vmatpush1.xpose.msra.mxu0 0.0
    %504 = vmatprep.subr.mxu0 0.0
    %505 = vmatpush1.xpose.msra.mxu0 0.0
    %506 = vmatprep.subr.mxu0 0.0
    %507 = vmatpush1.xpose.msra.mxu0 0.0
    %508 = vmatprep.subr.mxu0 0.0
    %509 = vmatpush1.xpose.msra.mxu0 0.0
    %510 = vmatprep.subr.mxu0 0.0
    %511 = vmatpush1.xpose.msra.mxu0 0.0
    %512 = vmatprep.subr.mxu0 0.0
    %513 = vmatpush1.xpose.msra.mxu0 0.0
    %514 = vmatprep.subr.mxu0 0.0
    %515 = vmatpush1.xpose.msra.mxu0 0.0
    %516 = vmatprep.subr.mxu0 0.0
    %517 = vmatpush1.xpose.msra.mxu0 0.0
    %518 = vmatprep.subr.mxu0 0.0
    %519 = vmatpush1.xpose.msra.mxu0 0.0
    %520 = vmatprep.subr.mxu0 0.0
    %521 = vmatpush1.xpose.msra.mxu0 0.0
    %522 = vmatprep.subr.mxu0 0.0
    %523 = vmatpush1.xpose.msra.mxu0 0.0
    %524 = vmatprep.subr.mxu0 0.0
    %525 = vmatpush1.xpose.msra.mxu0 0.0
    %526 = vmatprep.subr.mxu0 0.0
    %527 = vmatpush1.xpose.msra.mxu0 0.0
    %528 = vmatprep.subr.mxu0 0.0
    %529 = vmatpush1.xpose.msra.mxu0 0.0
    %530 = vmatprep.subr.mxu0 0.0
    %531 = vmatpush1.xpose.msra.mxu0 0.0
    %532 = vmatprep.subr.mxu0 0.0
    %533 = vmatpush1.xpose.msra.mxu0 0.0
    %534 = vmatprep.subr.mxu0 0.0
    %535 = vmatpush1.xpose.msra.mxu0 0.0
    %536 = vmatprep.subr.mxu0 0.0
    %537 = vmatpush1.xpose.msra.mxu0 0.0
    %538 = vmatprep.subr.mxu0 0.0
    %539 = vmatpush1.xpose.msra.mxu0 0.0
    %540 = vmatprep.subr.mxu0 0.0
    %541 = vmatpush1.xpose.msra.mxu0 0.0
    %542 = vmatprep.subr.mxu0 0.0
    %543 = vmatpush1.xpose.msra.mxu0 0.0
    %544 = vmatprep.mubr.f32.mxu0 0.0
    %545 = vmatmul.mubr.f32.gmra.mrb[0].mxu0 %v476
    %v546 = vpop.f32.mrb[0].mxu0
    %v547 = vadd.f32 0.0, %v546
    %v548 = vpop.f32.mrb[0].mxu0
    %549 = vdwg.mxu0
    %550 = vrot.lane.b32.xlu0 %v164, 96
    %v551 = vpop.permute.xlu0 %550
    %v552 = vsel %vm171, %v164, 0
    %v554 = vsel %vm171, %v551, 0
    %556 = vmatprep.subr.mxu0 0.0
    %557 = vmatpush1.xpose.msra.mxu0 %v554
    %558 = vmatprep.subr.mxu0 0.0
    %559 = vmatpush1.xpose.msra.mxu0 0.0
    %560 = vmatprep.subr.mxu0 0.0
    %561 = vmatpush1.xpose.msra.mxu0 0.0
    %562 = vmatprep.subr.mxu0 0.0
    %563 = vmatpush1.xpose.msra.mxu0 0.0
    %564 = vmatprep.subr.mxu0 0.0
    %565 = vmatpush1.xpose.msra.mxu0 0.0
    %566 = vmatprep.subr.mxu0 0.0
    %567 = vmatpush1.xpose.msra.mxu0 0.0
    %568 = vmatprep.subr.mxu0 0.0
    %569 = vmatpush1.xpose.msra.mxu0 0.0
    %570 = vmatprep.subr.mxu0 0.0
    %571 = vmatpush1.xpose.msra.mxu0 0.0
    %572 = vmatprep.subr.mxu0 0.0
    %573 = vmatpush1.xpose.msra.mxu0 0.0
    %574 = vmatprep.subr.mxu0 0.0
    %575 = vmatpush1.xpose.msra.mxu0 0.0
    %576 = vmatprep.subr.mxu0 0.0
    %577 = vmatpush1.xpose.msra.mxu0 0.0
    %578 = vmatprep.subr.mxu0 0.0
    %579 = vmatpush1.xpose.msra.mxu0 0.0
    %580 = vmatprep.subr.mxu0 0.0
    %581 = vmatpush1.xpose.msra.mxu0 0.0
    %582 = vmatprep.subr.mxu0 0.0
    %583 = vmatpush1.xpose.msra.mxu0 0.0
    %584 = vmatprep.subr.mxu0 0.0
    %585 = vmatpush1.xpose.msra.mxu0 0.0
    %586 = vmatprep.subr.mxu0 0.0
    %587 = vmatpush1.xpose.msra.mxu0 0.0
    %588 = vmatprep.subr.mxu0 0.0
    %589 = vmatpush1.xpose.msra.mxu0 0.0
    %590 = vmatprep.subr.mxu0 0.0
    %591 = vmatpush1.xpose.msra.mxu0 0.0
    %592 = vmatprep.subr.mxu0 0.0
    %593 = vmatpush1.xpose.msra.mxu0 0.0
    %594 = vmatprep.subr.mxu0 0.0
    %595 = vmatpush1.xpose.msra.mxu0 0.0
    %596 = vmatprep.subr.mxu0 0.0
    %597 = vmatpush1.xpose.msra.mxu0 0.0
    %598 = vmatprep.subr.mxu0 0.0
    %599 = vmatpush1.xpose.msra.mxu0 0.0
    %600 = vmatprep.subr.mxu0 0.0
    %601 = vmatpush1.xpose.msra.mxu0 0.0
    %602 = vmatprep.subr.mxu0 0.0
    %603 = vmatpush1.xpose.msra.mxu0 0.0
    %604 = vmatprep.subr.mxu0 0.0
    %605 = vmatpush1.xpose.msra.mxu0 0.0
    %606 = vmatprep.subr.mxu0 0.0
    %607 = vmatpush1.xpose.msra.mxu0 0.0
    %608 = vmatprep.subr.mxu0 0.0
    %609 = vmatpush1.xpose.msra.mxu0 0.0
    %610 = vmatprep.subr.mxu0 0.0
    %611 = vmatpush1.xpose.msra.mxu0 0.0
    %612 = vmatprep.subr.mxu0 0.0
    %613 = vmatpush1.xpose.msra.mxu0 0.0
    %614 = vmatprep.subr.mxu0 0.0
    %615 = vmatpush1.xpose.msra.mxu0 0.0
    %616 = vmatprep.subr.mxu0 0.0
    %617 = vmatpush1.xpose.msra.mxu0 0.0
    %618 = vmatprep.subr.mxu0 0.0
    %619 = vmatpush1.xpose.msra.mxu0 0.0
    %620 = vmatprep.mubr.f32.mxu0 0.0
    %621 = vmatmul.mubr.f32.gmra.mrb[0].mxu0 %v552
    %v622 = vpop.f32.mrb[0].mxu0
    %v623 = vadd.f32 0.0, %v622
    %v624 = vpop.f32.mrb[0].mxu0
    %625 = vdwg.mxu0
    %626 = vrot.lane.b32.xlu0 %v166, 96
    %v627 = vpop.permute.xlu0 %626
    %v628 = vsel %vm171, %v166, 0
    %v630 = vsel %vm171, %v627, 0
    %632 = vmatprep.subr.mxu0 0.0
    %633 = vmatpush1.xpose.msra.mxu0 %v630
    %634 = vmatprep.subr.mxu0 0.0
    %635 = vmatpush1.xpose.msra.mxu0 0.0
    %636 = vmatprep.subr.mxu0 0.0
    %637 = vmatpush1.xpose.msra.mxu0 0.0
    %638 = vmatprep.subr.mxu0 0.0
    %639 = vmatpush1.xpose.msra.mxu0 0.0
    %640 = vmatprep.subr.mxu0 0.0
    %641 = vmatpush1.xpose.msra.mxu0 0.0
    %642 = vmatprep.subr.mxu0 0.0
    %643 = vmatpush1.xpose.msra.mxu0 0.0
    %644 = vmatprep.subr.mxu0 0.0
    %645 = vmatpush1.xpose.msra.mxu0 0.0
    %646 = vmatprep.subr.mxu0 0.0
    %647 = vmatpush1.xpose.msra.mxu0 0.0
    %648 = vmatprep.subr.mxu0 0.0
    %649 = vmatpush1.xpose.msra.mxu0 0.0
    %650 = vmatprep.subr.mxu0 0.0
    %651 = vmatpush1.xpose.msra.mxu0 0.0
    %652 = vmatprep.subr.mxu0 0.0
    %653 = vmatpush1.xpose.msra.mxu0 0.0
    %654 = vmatprep.subr.mxu0 0.0
    %655 = vmatpush1.xpose.msra.mxu0 0.0
    %656 = vmatprep.subr.mxu0 0.0
    %657 = vmatpush1.xpose.msra.mxu0 0.0
    %658 = vmatprep.subr.mxu0 0.0
    %659 = vmatpush1.xpose.msra.mxu0 0.0
    %660 = vmatprep.subr.mxu0 0.0
    %661 = vmatpush1.xpose.msra.mxu0 0.0
    %662 = vmatprep.subr.mxu0 0.0
    %663 = vmatpush1.xpose.msra.mxu0 0.0
    %664 = vmatprep.subr.mxu0 0.0
    %665 = vmatpush1.xpose.msra.mxu0 0.0
    %666 = vmatprep.subr.mxu0 0.0
    %667 = vmatpush1.xpose.msra.mxu0 0.0
    %668 = vmatprep.subr.mxu0 0.0
    %669 = vmatpush1.xpose.msra.mxu0 0.0
    %670 = vmatprep.subr.mxu0 0.0
    %671 = vmatpush1.xpose.msra.mxu0 0.0
    %672 = vmatprep.subr.mxu0 0.0
    %673 = vmatpush1.xpose.msra.mxu0 0.0
    %674 = vmatprep.subr.mxu0 0.0
    %675 = vmatpush1.xpose.msra.mxu0 0.0
    %676 = vmatprep.subr.mxu0 0.0
    %677 = vmatpush1.xpose.msra.mxu0 0.0
    %678 = vmatprep.subr.mxu0 0.0
    %679 = vmatpush1.xpose.msra.mxu0 0.0
    %680 = vmatprep.subr.mxu0 0.0
    %681 = vmatpush1.xpose.msra.mxu0 0.0
    %682 = vmatprep.subr.mxu0 0.0
    %683 = vmatpush1.xpose.msra.mxu0 0.0
    %684 = vmatprep.subr.mxu0 0.0
    %685 = vmatpush1.xpose.msra.mxu0 0.0
    %686 = vmatprep.subr.mxu0 0.0
    %687 = vmatpush1.xpose.msra.mxu0 0.0
    %688 = vmatprep.subr.mxu0 0.0
    %689 = vmatpush1.xpose.msra.mxu0 0.0
    %690 = vmatprep.subr.mxu0 0.0
    %691 = vmatpush1.xpose.msra.mxu0 0.0
    %692 = vmatprep.subr.mxu0 0.0
    %693 = vmatpush1.xpose.msra.mxu0 0.0
    %694 = vmatprep.subr.mxu0 0.0
    %695 = vmatpush1.xpose.msra.mxu0 0.0
    %696 = vmatprep.mubr.f32.mxu0 0.0
    %697 = vmatmul.mubr.f32.gmra.mrb[0].mxu0 %v628
    %v698 = vpop.f32.mrb[0].mxu0
    %v699 = vadd.f32 0.0, %v698
    %v700 = vpop.f32.mrb[0].mxu0
    %701 = vdwg.mxu0
    %702 = vrot.lane.b32.xlu0 %v168, 96
    %v703 = vpop.permute.xlu0 %702
    %v704 = vsel %vm171, %v168, 0
    %v706 = vsel %vm171, %v703, 0
    %708 = vmatprep.subr.mxu0 0.0
    %709 = vmatpush1.xpose.msra.mxu0 %v706
    %710 = vmatprep.subr.mxu0 0.0
    %711 = vmatpush1.xpose.msra.mxu0 0.0
    %712 = vmatprep.subr.mxu0 0.0
    %713 = vmatpush1.xpose.msra.mxu0 0.0
    %714 = vmatprep.subr.mxu0 0.0
    %715 = vmatpush1.xpose.msra.mxu0 0.0
    %716 = vmatprep.subr.mxu0 0.0
    %717 = vmatpush1.xpose.msra.mxu0 0.0
    %718 = vmatprep.subr.mxu0 0.0
    %719 = vmatpush1.xpose.msra.mxu0 0.0
    %720 = vmatprep.subr.mxu0 0.0
    %721 = vmatpush1.xpose.msra.mxu0 0.0
    %722 = vmatprep.subr.mxu0 0.0
    %723 = vmatpush1.xpose.msra.mxu0 0.0
    %724 = vmatprep.subr.mxu0 0.0
    %725 = vmatpush1.xpose.msra.mxu0 0.0
    %726 = vmatprep.subr.mxu0 0.0
    %727 = vmatpush1.xpose.msra.mxu0 0.0
    %728 = vmatprep.subr.mxu0 0.0
    %729 = vmatpush1.xpose.msra.mxu0 0.0
    %730 = vmatprep.subr.mxu0 0.0
    %731 = vmatpush1.xpose.msra.mxu0 0.0
    %732 = vmatprep.subr.mxu0 0.0
    %733 = vmatpush1.xpose.msra.mxu0 0.0
    %734 = vmatprep.subr.mxu0 0.0
    %735 = vmatpush1.xpose.msra.mxu0 0.0
    %736 = vmatprep.subr.mxu0 0.0
    %737 = vmatpush1.xpose.msra.mxu0 0.0
    %738 = vmatprep.subr.mxu0 0.0
    %739 = vmatpush1.xpose.msra.mxu0 0.0
    %740 = vmatprep.subr.mxu0 0.0
    %741 = vmatpush1.xpose.msra.mxu0 0.0
    %742 = vmatprep.subr.mxu0 0.0
    %743 = vmatpush1.xpose.msra.mxu0 0.0
    %744 = vmatprep.subr.mxu0 0.0
    %745 = vmatpush1.xpose.msra.mxu0 0.0
    %746 = vmatprep.subr.mxu0 0.0
    %747 = vmatpush1.xpose.msra.mxu0 0.0
    %748 = vmatprep.subr.mxu0 0.0
    %749 = vmatpush1.xpose.msra.mxu0 0.0
    %750 = vmatprep.subr.mxu0 0.0
    %751 = vmatpush1.xpose.msra.mxu0 0.0
    %752 = vmatprep.subr.mxu0 0.0
    %753 = vmatpush1.xpose.msra.mxu0 0.0
    %754 = vmatprep.subr.mxu0 0.0
    %755 = vmatpush1.xpose.msra.mxu0 0.0
    %756 = vmatprep.subr.mxu0 0.0
    %757 = vmatpush1.xpose.msra.mxu0 0.0
    %758 = vmatprep.subr.mxu0 0.0
    %759 = vmatpush1.xpose.msra.mxu0 0.0
    %760 = vmatprep.subr.mxu0 0.0
    %761 = vmatpush1.xpose.msra.mxu0 0.0
    %762 = vmatprep.subr.mxu0 0.0
    %763 = vmatpush1.xpose.msra.mxu0 0.0
    %764 = vmatprep.subr.mxu0 0.0
    %765 = vmatpush1.xpose.msra.mxu0 0.0
    %766 = vmatprep.subr.mxu0 0.0
    %767 = vmatpush1.xpose.msra.mxu0 0.0
    %768 = vmatprep.subr.mxu0 0.0
    %769 = vmatpush1.xpose.msra.mxu0 0.0
    %770 = vmatprep.subr.mxu0 0.0
    %771 = vmatpush1.xpose.msra.mxu0 0.0
    %772 = vmatprep.mubr.f32.mxu0 0.0
    %773 = vmatmul.mubr.f32.gmra.mrb[0].mxu0 %v704
    %v774 = vpop.f32.mrb[0].mxu0
    %v775 = vadd.f32 0.0, %v774
    %v776 = vpop.f32.mrb[0].mxu0
    %777 = vdwg.mxu0
    %v778 = vsel %vm171, %v243, -inf
    %779 = vmax.xlane.f32.xlu0 %v778
    %v780 = vpop.xlane.xlu0 %779
    %v781 = vsel %vm171, %v319, -inf
    %782 = vmax.xlane.f32.xlu0 %v781
    %v783 = vpop.xlane.xlu0 %782
    %v784 = vsel %vm171, %v395, -inf
    %785 = vmax.xlane.f32.xlu0 %v784
    %v786 = vpop.xlane.xlu0 %785
    %v787 = vsel %vm171, %v471, -inf
    %788 = vmax.xlane.f32.xlu0 %v787
    %v789 = vpop.xlane.xlu0 %788
    %v790 = vsel %vm171, %v547, -inf
    %791 = vmax.xlane.f32.xlu0 %v790
    %v792 = vpop.xlane.xlu0 %791
    %v793 = vsel %vm171, %v623, -inf
    %794 = vmax.xlane.f32.xlu0 %v793
    %v795 = vpop.xlane.xlu0 %794
    %v796 = vsel %vm171, %v699, -inf
    %797 = vmax.xlane.f32.xlu0 %v796
    %v798 = vpop.xlane.xlu0 %797
    %v799 = vsel %vm171, %v775, -inf
    %800 = vmax.xlane.f32.xlu0 %v799
    %v801 = vpop.xlane.xlu0 %800
    %v802 = vsub.f32 %v243, %v780
    %v803 = vsub.f32 %v319, %v783
    %v804 = vsub.f32 %v395, %v786
    %v805 = vsub.f32 %v471, %v789
    %v806 = vsub.f32 %v547, %v792
    %v807 = vsub.f32 %v623, %v795
    %v808 = vsub.f32 %v699, %v798
    %v809 = vsub.f32 %v775, %v801
    %v810 = vmul.f32 %v802, 1.442695
    %v811 = vpow.pop %v810
    %v812 = vmul.f32 %v803, 1.442695
    %v813 = vpow.pop %v812
    %v814 = vmul.f32 %v804, 1.442695
    %v815 = vpow.pop %v814
    %v816 = vmul.f32 %v805, 1.442695
    %v817 = vpow.pop %v816
    %v818 = vmul.f32 %v806, 1.442695
    %v819 = vpow.pop %v818
    %v820 = vmul.f32 %v807, 1.442695
    %v821 = vpow.pop %v820
    %v822 = vmul.f32 %v808, 1.442695
    %v823 = vpow.pop %v822
    %v824 = vmul.f32 %v809, 1.442695
    %v825 = vpow.pop %v824
    %v826 = vsel %vm171, %v811, 0.0
    %827 = vadd.xlane.f32.xlu0 %v826
    %v828 = vpop.xlane.xlu0 %827
    %v829 = vsel %vm171, %v813, 0.0
    %830 = vadd.xlane.f32.xlu0 %v829
    %v831 = vpop.xlane.xlu0 %830
    %v832 = vsel %vm171, %v815, 0.0
    %833 = vadd.xlane.f32.xlu0 %v832
    %v834 = vpop.xlane.xlu0 %833
    %v835 = vsel %vm171, %v817, 0.0
    %836 = vadd.xlane.f32.xlu0 %v835
    %v837 = vpop.xlane.xlu0 %836
    %v838 = vsel %vm171, %v819, 0.0
    %839 = vadd.xlane.f32.xlu0 %v838
    %v840 = vpop.xlane.xlu0 %839
    %v841 = vsel %vm171, %v821, 0.0
    %842 = vadd.xlane.f32.xlu0 %v841
    %v843 = vpop.xlane.xlu0 %842
    %v844 = vsel %vm171, %v823, 0.0
    %845 = vadd.xlane.f32.xlu0 %v844
    %v846 = vpop.xlane.xlu0 %845
    %v847 = vsel %vm171, %v825, 0.0
    %848 = vadd.xlane.f32.xlu0 %v847
    %v849 = vpop.xlane.xlu0 %848
    %v850 = vrcp.pop %v828
    %v851 = vmul.f32 %v811, %v850
    %v852 = vrcp.pop %v831
    %v853 = vmul.f32 %v813, %v852
    %v854 = vrcp.pop %v834
    %v855 = vmul.f32 %v815, %v854
    %v856 = vrcp.pop %v837
    %v857 = vmul.f32 %v817, %v856
    %v858 = vrcp.pop %v840
    %v859 = vmul.f32 %v819, %v858
    %v860 = vrcp.pop %v843
    %v861 = vmul.f32 %v821, %v860
    %v862 = vrcp.pop %v846
    %v863 = vmul.f32 %v823, %v862
    %v864 = vrcp.pop %v849
    %v865 = vmul.f32 %v825, %v864
    %866 = vrot.lane.b32.xlu0 %v147, 64
    %v867 = vpop.permute.xlu0 %866
    %v870 = vsel %vm171, %v851, 0
    %872 = vmatprep.subr.mxu0 0.0
    %873 = vmatpush1.msra.mxu0 %v867
    %874 = vmatprep.subr.mxu0 0.0
    %875 = vmatpush1.msra.mxu0 0.0
    %876 = vmatprep.subr.mxu0 0.0
    %877 = vmatpush1.msra.mxu0 0.0
    %878 = vmatprep.subr.mxu0 0.0
    %879 = vmatpush1.msra.mxu0 0.0
    %880 = vmatprep.subr.mxu0 0.0
    %881 = vmatpush1.msra.mxu0 0.0
    %882 = vmatprep.subr.mxu0 0.0
    %883 = vmatpush1.msra.mxu0 0.0
    %884 = vmatprep.subr.mxu0 0.0
    %885 = vmatpush1.msra.mxu0 0.0
    %886 = vmatprep.subr.mxu0 0.0
    %887 = vmatpush1.msra.mxu0 0.0
    %888 = vmatprep.subr.mxu0 0.0
    %889 = vmatpush1.msra.mxu0 0.0
    %890 = vmatprep.subr.mxu0 0.0
    %891 = vmatpush1.msra.mxu0 0.0
    %892 = vmatprep.subr.mxu0 0.0
    %893 = vmatpush1.msra.mxu0 0.0
    %894 = vmatprep.subr.mxu0 0.0
    %895 = vmatpush1.msra.mxu0 0.0
    %896 = vmatprep.subr.mxu0 0.0
    %897 = vmatpush1.msra.mxu0 0.0
    %898 = vmatprep.subr.mxu0 0.0
    %899 = vmatpush1.msra.mxu0 0.0
    %900 = vmatprep.subr.mxu0 0.0
    %901 = vmatpush1.msra.mxu0 0.0
    %902 = vmatprep.subr.mxu0 0.0
    %903 = vmatpush1.msra.mxu0 0.0
    %904 = vmatprep.subr.mxu0 0.0
    %905 = vmatpush1.msra.mxu0 0.0
    %906 = vmatprep.subr.mxu0 0.0
    %907 = vmatpush1.msra.mxu0 0.0
    %908 = vmatprep.subr.mxu0 0.0
    %909 = vmatpush1.msra.mxu0 0.0
    %910 = vmatprep.subr.mxu0 0.0
    %911 = vmatpush1.msra.mxu0 0.0
    %912 = vmatprep.subr.mxu0 0.0
    %913 = vmatpush1.msra.mxu0 0.0
    %914 = vmatprep.subr.mxu0 0.0
    %915 = vmatpush1.msra.mxu0 0.0
    %916 = vmatprep.subr.mxu0 0.0
    %917 = vmatpush1.msra.mxu0 0.0
    %918 = vmatprep.subr.mxu0 0.0
    %919 = vmatpush1.msra.mxu0 0.0
    %920 = vmatprep.subr.mxu0 0.0
    %921 = vmatpush1.msra.mxu0 0.0
    %922 = vmatprep.subr.mxu0 0.0
    %923 = vmatpush1.msra.mxu0 0.0
    %924 = vmatprep.subr.mxu0 0.0
    %925 = vmatpush1.msra.mxu0 0.0
    %926 = vmatprep.subr.mxu0 0.0
    %927 = vmatpush1.msra.mxu0 0.0
    %928 = vmatprep.subr.mxu0 0.0
    %929 = vmatpush1.msra.mxu0 0.0
    %930 = vmatprep.subr.mxu0 0.0
    %931 = vmatpush1.msra.mxu0 0.0
    %932 = vmatprep.subr.mxu0 0.0
    %933 = vmatpush1.msra.mxu0 0.0
    %934 = vmatprep.subr.mxu0 0.0
    %935 = vmatpush1.msra.mxu0 0.0
    %936 = vmatprep.mubr.f32.mxu0 0.0
    %937 = vmatmul.mubr.f32.gmra.mrb[0].mxu0 %v870
    %v938 = vpop.f32.mrb[0].mxu0
    %v939 = vadd.f32 0.0, %v938
    %v940 = vpop.f32.mrb[0].mxu0
    %941 = vdwg.mxu0
    %942 = vrot.lane.b32.xlu0 %v152, 64
    %v943 = vpop.permute.xlu0 %942
    %v946 = vsel %vm171, %v853, 0
    %948 = vmatprep.subr.mxu0 0.0
    %949 = vmatpush1.msra.mxu0 %v943
    %950 = vmatprep.subr.mxu0 0.0
    %951 = vmatpush1.msra.mxu0 0.0
    %952 = vmatprep.subr.mxu0 0.0
    %953 = vmatpush1.msra.mxu0 0.0
    %954 = vmatprep.subr.mxu0 0.0
    %955 = vmatpush1.msra.mxu0 0.0
    %956 = vmatprep.subr.mxu0 0.0
    %957 = vmatpush1.msra.mxu0 0.0
    %958 = vmatprep.subr.mxu0 0.0
    %959 = vmatpush1.msra.mxu0 0.0
    %960 = vmatprep.subr.mxu0 0.0
    %961 = vmatpush1.msra.mxu0 0.0
    %962 = vmatprep.subr.mxu0 0.0
    %963 = vmatpush1.msra.mxu0 0.0
    %964 = vmatprep.subr.mxu0 0.0
    %965 = vmatpush1.msra.mxu0 0.0
    %966 = vmatprep.subr.mxu0 0.0
    %967 = vmatpush1.msra.mxu0 0.0
    %968 = vmatprep.subr.mxu0 0.0
    %969 = vmatpush1.msra.mxu0 0.0
    %970 = vmatprep.subr.mxu0 0.0
    %971 = vmatpush1.msra.mxu0 0.0
    %972 = vmatprep.subr.mxu0 0.0
    %973 = vmatpush1.msra.mxu0 0.0
    %974 = vmatprep.subr.mxu0 0.0
    %975 = vmatpush1.msra.mxu0 0.0
    %976 = vmatprep.subr.mxu0 0.0
    %977 = vmatpush1.msra.mxu0 0.0
    %978 = vmatprep.subr.mxu0 0.0
    %979 = vmatpush1.msra.mxu0 0.0
    %980 = vmatprep.subr.mxu0 0.0
    %981 = vmatpush1.msra.mxu0 0.0
    %982 = vmatprep.subr.mxu0 0.0
    %983 = vmatpush1.msra.mxu0 0.0
    %984 = vmatprep.subr.mxu0 0.0
    %985 = vmatpush1.msra.mxu0 0.0
    %986 = vmatprep.subr.mxu0 0.0
    %987 = vmatpush1.msra.mxu0 0.0
    %988 = vmatprep.subr.mxu0 0.0
    %989 = vmatpush1.msra.mxu0 0.0
    %990 = vmatprep.subr.mxu0 0.0
    %991 = vmatpush1.msra.mxu0 0.0
    %992 = vmatprep.subr.mxu0 0.0
    %993 = vmatpush1.msra.mxu0 0.0
    %994 = vmatprep.subr.mxu0 0.0
    %995 = vmatpush1.msra.mxu0 0.0
    %996 = vmatprep.subr.mxu0 0.0
    %997 = vmatpush1.msra.mxu0 0.0
    %998 = vmatprep.subr.mxu0 0.0
    %999 = vmatpush1.msra.mxu0 0.0
    %1000 = vmatprep.subr.mxu0 0.0
    %1001 = vmatpush1.msra.mxu0 0.0
    %1002 = vmatprep.subr.mxu0 0.0
    %1003 = vmatpush1.msra.mxu0 0.0
    %1004 = vmatprep.subr.mxu0 0.0
    %1005 = vmatpush1.msra.mxu0 0.0
    %1006 = vmatprep.subr.mxu0 0.0
    %1007 = vmatpush1.msra.mxu0 0.0
    %1008 = vmatprep.subr.mxu0 0.0
    %1009 = vmatpush1.msra.mxu0 0.0
    %1010 = vmatprep.subr.mxu0 0.0
    %1011 = vmatpush1.msra.mxu0 0.0
    %1012 = vmatprep.mubr.f32.mxu0 0.0
    %1013 = vmatmul.mubr.f32.gmra.mrb[0].mxu0 %v946
    %v1014 = vpop.f32.mrb[0].mxu0
    %v1015 = vadd.f32 0.0, %v1014
    %v1016 = vpop.f32.mrb[0].mxu0
    %1017 = vdwg.mxu0
    %1018 = vrot.lane.b32.xlu0 %v158, 64
    %v1019 = vpop.permute.xlu0 %1018
    %v1022 = vsel %vm171, %v855, 0
    %1024 = vmatprep.subr.mxu0 0.0
    %1025 = vmatpush1.msra.mxu0 %v1019
    %1026 = vmatprep.subr.mxu0 0.0
    %1027 = vmatpush1.msra.mxu0 0.0
    %1028 = vmatprep.subr.mxu0 0.0
    %1029 = vmatpush1.msra.mxu0 0.0
    %1030 = vmatprep.subr.mxu0 0.0
    %1031 = vmatpush1.msra.mxu0 0.0
    %1032 = vmatprep.subr.mxu0 0.0
    %1033 = vmatpush1.msra.mxu0 0.0
    %1034 = vmatprep.subr.mxu0 0.0
    %1035 = vmatpush1.msra.mxu0 0.0
    %1036 = vmatprep.subr.mxu0 0.0
    %1037 = vmatpush1.msra.mxu0 0.0
    %1038 = vmatprep.subr.mxu0 0.0
    %1039 = vmatpush1.msra.mxu0 0.0
    %1040 = vmatprep.subr.mxu0 0.0
    %1041 = vmatpush1.msra.mxu0 0.0
    %1042 = vmatprep.subr.mxu0 0.0
    %1043 = vmatpush1.msra.mxu0 0.0
    %1044 = vmatprep.subr.mxu0 0.0
    %1045 = vmatpush1.msra.mxu0 0.0
    %1046 = vmatprep.subr.mxu0 0.0
    %1047 = vmatpush1.msra.mxu0 0.0
    %1048 = vmatprep.subr.mxu0 0.0
    %1049 = vmatpush1.msra.mxu0 0.0
    %1050 = vmatprep.subr.mxu0 0.0
    %1051 = vmatpush1.msra.mxu0 0.0
    %1052 = vmatprep.subr.mxu0 0.0
    %1053 = vmatpush1.msra.mxu0 0.0
    %1054 = vmatprep.subr.mxu0 0.0
    %1055 = vmatpush1.msra.mxu0 0.0
    %1056 = vmatprep.subr.mxu0 0.0
    %1057 = vmatpush1.msra.mxu0 0.0
    %1058 = vmatprep.subr.mxu0 0.0
    %1059 = vmatpush1.msra.mxu0 0.0
    %1060 = vmatprep.subr.mxu0 0.0
    %1061 = vmatpush1.msra.mxu0 0.0
    %1062 = vmatprep.subr.mxu0 0.0
    %1063 = vmatpush1.msra.mxu0 0.0
    %1064 = vmatprep.subr.mxu0 0.0
    %1065 = vmatpush1.msra.mxu0 0.0
    %1066 = vmatprep.subr.mxu0 0.0
    %1067 = vmatpush1.msra.mxu0 0.0
    %1068 = vmatprep.subr.mxu0 0.0
    %1069 = vmatpush1.msra.mxu0 0.0
    %1070 = vmatprep.subr.mxu0 0.0
    %1071 = vmatpush1.msra.mxu0 0.0
    %1072 = vmatprep.subr.mxu0 0.0
    %1073 = vmatpush1.msra.mxu0 0.0
    %1074 = vmatprep.subr.mxu0 0.0
    %1075 = vmatpush1.msra.mxu0 0.0
    %1076 = vmatprep.subr.mxu0 0.0
    %1077 = vmatpush1.msra.mxu0 0.0
    %1078 = vmatprep.subr.mxu0 0.0
    %1079 = vmatpush1.msra.mxu0 0.0
    %1080 = vmatprep.subr.mxu0 0.0
    %1081 = vmatpush1.msra.mxu0 0.0
    %1082 = vmatprep.subr.mxu0 0.0
    %1083 = vmatpush1.msra.mxu0 0.0
    %1084 = vmatprep.subr.mxu0 0.0
    %1085 = vmatpush1.msra.mxu0 0.0
    %1086 = vmatprep.subr.mxu0 0.0
    %1087 = vmatpush1.msra.mxu0 0.0
    %1088 = vmatprep.mubr.f32.mxu0 0.0
    %1089 = vmatmul.mubr.f32.gmra.mrb[0].mxu0 %v1022
    %v1090 = vpop.f32.mrb[0].mxu0
    %v1091 = vadd.f32 0.0, %v1090
    %v1092 = vpop.f32.mrb[0].mxu0
    %1093 = vdwg.mxu0
    %1094 = vrot.lane.b32.xlu0 %v160, 64
    %v1095 = vpop.permute.xlu0 %1094
    %v1098 = vsel %vm171, %v857, 0
    %1100 = vmatprep.subr.mxu0 0.0
    %1101 = vmatpush1.msra.mxu0 %v1095
    %1102 = vmatprep.subr.mxu0 0.0
    %1103 = vmatpush1.msra.mxu0 0.0
    %1104 = vmatprep.subr.mxu0 0.0
    %1105 = vmatpush1.msra.mxu0 0.0
    %1106 = vmatprep.subr.mxu0 0.0
    %1107 = vmatpush1.msra.mxu0 0.0
    %1108 = vmatprep.subr.mxu0 0.0
    %1109 = vmatpush1.msra.mxu0 0.0
    %1110 = vmatprep.subr.mxu0 0.0
    %1111 = vmatpush1.msra.mxu0 0.0
    %1112 = vmatprep.subr.mxu0 0.0
    %1113 = vmatpush1.msra.mxu0 0.0
    %1114 = vmatprep.subr.mxu0 0.0
    %1115 = vmatpush1.msra.mxu0 0.0
    %1116 = vmatprep.subr.mxu0 0.0
    %1117 = vmatpush1.msra.mxu0 0.0
    %1118 = vmatprep.subr.mxu0 0.0
    %1119 = vmatpush1.msra.mxu0 0.0
    %1120 = vmatprep.subr.mxu0 0.0
    %1121 = vmatpush1.msra.mxu0 0.0
    %1122 = vmatprep.subr.mxu0 0.0
    %1123 = vmatpush1.msra.mxu0 0.0
    %1124 = vmatprep.subr.mxu0 0.0
    %1125 = vmatpush1.msra.mxu0 0.0
    %1126 = vmatprep.subr.mxu0 0.0
    %1127 = vmatpush1.msra.mxu0 0.0
    %1128 = vmatprep.subr.mxu0 0.0
    %1129 = vmatpush1.msra.mxu0 0.0
    %1130 = vmatprep.subr.mxu0 0.0
    %1131 = vmatpush1.msra.mxu0 0.0
    %1132 = vmatprep.subr.mxu0 0.0
    %1133 = vmatpush1.msra.mxu0 0.0
    %1134 = vmatprep.subr.mxu0 0.0
    %1135 = vmatpush1.msra.mxu0 0.0
    %1136 = vmatprep.subr.mxu0 0.0
    %1137 = vmatpush1.msra.mxu0 0.0
    %1138 = vmatprep.subr.mxu0 0.0
    %1139 = vmatpush1.msra.mxu0 0.0
    %1140 = vmatprep.subr.mxu0 0.0
    %1141 = vmatpush1.msra.mxu0 0.0
    %1142 = vmatprep.subr.mxu0 0.0
    %1143 = vmatpush1.msra.mxu0 0.0
    %1144 = vmatprep.subr.mxu0 0.0
    %1145 = vmatpush1.msra.mxu0 0.0
    %1146 = vmatprep.subr.mxu0 0.0
    %1147 = vmatpush1.msra.mxu0 0.0
    %1148 = vmatprep.subr.mxu0 0.0
    %1149 = vmatpush1.msra.mxu0 0.0
    %1150 = vmatprep.subr.mxu0 0.0
    %1151 = vmatpush1.msra.mxu0 0.0
    %1152 = vmatprep.subr.mxu0 0.0
    %1153 = vmatpush1.msra.mxu0 0.0
    %1154 = vmatprep.subr.mxu0 0.0
    %1155 = vmatpush1.msra.mxu0 0.0
    %1156 = vmatprep.subr.mxu0 0.0
    %1157 = vmatpush1.msra.mxu0 0.0
    %1158 = vmatprep.subr.mxu0 0.0
    %1159 = vmatpush1.msra.mxu0 0.0
    %1160 = vmatprep.subr.mxu0 0.0
    %1161 = vmatpush1.msra.mxu0 0.0
    %1162 = vmatprep.subr.mxu0 0.0
    %1163 = vmatpush1.msra.mxu0 0.0
    %1164 = vmatprep.mubr.f32.mxu0 0.0
    %1165 = vmatmul.mubr.f32.gmra.mrb[0].mxu0 %v1098
    %v1166 = vpop.f32.mrb[0].mxu0
    %v1167 = vadd.f32 0.0, %v1166
    %v1168 = vpop.f32.mrb[0].mxu0
    %1169 = vdwg.mxu0
    %1170 = vrot.lane.b32.xlu0 %v162, 64
    %v1171 = vpop.permute.xlu0 %1170
    %v1174 = vsel %vm171, %v859, 0
    %1176 = vmatprep.subr.mxu0 0.0
    %1177 = vmatpush1.msra.mxu0 %v1171
    %1178 = vmatprep.subr.mxu0 0.0
    %1179 = vmatpush1.msra.mxu0 0.0
    %1180 = vmatprep.subr.mxu0 0.0
    %1181 = vmatpush1.msra.mxu0 0.0
    %1182 = vmatprep.subr.mxu0 0.0
    %1183 = vmatpush1.msra.mxu0 0.0
    %1184 = vmatprep.subr.mxu0 0.0
    %1185 = vmatpush1.msra.mxu0 0.0
    %1186 = vmatprep.subr.mxu0 0.0
    %1187 = vmatpush1.msra.mxu0 0.0
    %1188 = vmatprep.subr.mxu0 0.0
    %1189 = vmatpush1.msra.mxu0 0.0
    %1190 = vmatprep.subr.mxu0 0.0
    %1191 = vmatpush1.msra.mxu0 0.0
    %1192 = vmatprep.subr.mxu0 0.0
    %1193 = vmatpush1.msra.mxu0 0.0
    %1194 = vmatprep.subr.mxu0 0.0
    %1195 = vmatpush1.msra.mxu0 0.0
    %1196 = vmatprep.subr.mxu0 0.0
    %1197 = vmatpush1.msra.mxu0 0.0
    %1198 = vmatprep.subr.mxu0 0.0
    %1199 = vmatpush1.msra.mxu0 0.0
    %1200 = vmatprep.subr.mxu0 0.0
    %1201 = vmatpush1.msra.mxu0 0.0
    %1202 = vmatprep.subr.mxu0 0.0
    %1203 = vmatpush1.msra.mxu0 0.0
    %1204 = vmatprep.subr.mxu0 0.0
    %1205 = vmatpush1.msra.mxu0 0.0
    %1206 = vmatprep.subr.mxu0 0.0
    %1207 = vmatpush1.msra.mxu0 0.0
    %1208 = vmatprep.subr.mxu0 0.0
    %1209 = vmatpush1.msra.mxu0 0.0
    %1210 = vmatprep.subr.mxu0 0.0
    %1211 = vmatpush1.msra.mxu0 0.0
    %1212 = vmatprep.subr.mxu0 0.0
    %1213 = vmatpush1.msra.mxu0 0.0
    %1214 = vmatprep.subr.mxu0 0.0
    %1215 = vmatpush1.msra.mxu0 0.0
    %1216 = vmatprep.subr.mxu0 0.0
    %1217 = vmatpush1.msra.mxu0 0.0
    %1218 = vmatprep.subr.mxu0 0.0
    %1219 = vmatpush1.msra.mxu0 0.0
    %1220 = vmatprep.subr.mxu0 0.0
    %1221 = vmatpush1.msra.mxu0 0.0
    %1222 = vmatprep.subr.mxu0 0.0
    %1223 = vmatpush1.msra.mxu0 0.0
    %1224 = vmatprep.subr.mxu0 0.0
    %1225 = vmatpush1.msra.mxu0 0.0
    %1226 = vmatprep.subr.mxu0 0.0
    %1227 = vmatpush1.msra.mxu0 0.0
    %1228 = vmatprep.subr.mxu0 0.0
    %1229 = vmatpush1.msra.mxu0 0.0
    %1230 = vmatprep.subr.mxu0 0.0
    %1231 = vmatpush1.msra.mxu0 0.0
    %1232 = vmatprep.subr.mxu0 0.0
    %1233 = vmatpush1.msra.mxu0 0.0
    %1234 = vmatprep.subr.mxu0 0.0
    %1235 = vmatpush1.msra.mxu0 0.0
    %1236 = vmatprep.subr.mxu0 0.0
    %1237 = vmatpush1.msra.mxu0 0.0
    %1238 = vmatprep.subr.mxu0 0.0
    %1239 = vmatpush1.msra.mxu0 0.0
    %1240 = vmatprep.mubr.f32.mxu0 0.0
    %1241 = vmatmul.mubr.f32.gmra.mrb[0].mxu0 %v1174
    %v1242 = vpop.f32.mrb[0].mxu0
    %v1243 = vadd.f32 0.0, %v1242
    %v1244 = vpop.f32.mrb[0].mxu0
    %1245 = vdwg.mxu0
    %1246 = vrot.lane.b32.xlu0 %v164, 64
    %v1247 = vpop.permute.xlu0 %1246
    %v1250 = vsel %vm171, %v861, 0
    %1252 = vmatprep.subr.mxu0 0.0
    %1253 = vmatpush1.msra.mxu0 %v1247
    %1254 = vmatprep.subr.mxu0 0.0
    %1255 = vmatpush1.msra.mxu0 0.0
    %1256 = vmatprep.subr.mxu0 0.0
    %1257 = vmatpush1.msra.mxu0 0.0
    %1258 = vmatprep.subr.mxu0 0.0
    %1259 = vmatpush1.msra.mxu0 0.0
    %1260 = vmatprep.subr.mxu0 0.0
    %1261 = vmatpush1.msra.mxu0 0.0
    %1262 = vmatprep.subr.mxu0 0.0
    %1263 = vmatpush1.msra.mxu0 0.0
    %1264 = vmatprep.subr.mxu0 0.0
    %1265 = vmatpush1.msra.mxu0 0.0
    %1266 = vmatprep.subr.mxu0 0.0
    %1267 = vmatpush1.msra.mxu0 0.0
    %1268 = vmatprep.subr.mxu0 0.0
    %1269 = vmatpush1.msra.mxu0 0.0
    %1270 = vmatprep.subr.mxu0 0.0
    %1271 = vmatpush1.msra.mxu0 0.0
    %1272 = vmatprep.subr.mxu0 0.0
    %1273 = vmatpush1.msra.mxu0 0.0
    %1274 = vmatprep.subr.mxu0 0.0
    %1275 = vmatpush1.msra.mxu0 0.0
    %1276 = vmatprep.subr.mxu0 0.0
    %1277 = vmatpush1.msra.mxu0 0.0
    %1278 = vmatprep.subr.mxu0 0.0
    %1279 = vmatpush1.msra.mxu0 0.0
    %1280 = vmatprep.subr.mxu0 0.0
    %1281 = vmatpush1.msra.mxu0 0.0
    %1282 = vmatprep.subr.mxu0 0.0
    %1283 = vmatpush1.msra.mxu0 0.0
    %1284 = vmatprep.subr.mxu0 0.0
    %1285 = vmatpush1.msra.mxu0 0.0
    %1286 = vmatprep.subr.mxu0 0.0
    %1287 = vmatpush1.msra.mxu0 0.0
    %1288 = vmatprep.subr.mxu0 0.0
    %1289 = vmatpush1.msra.mxu0 0.0
    %1290 = vmatprep.subr.mxu0 0.0
    %1291 = vmatpush1.msra.mxu0 0.0
    %1292 = vmatprep.subr.mxu0 0.0
    %1293 = vmatpush1.msra.mxu0 0.0
    %1294 = vmatprep.subr.mxu0 0.0
    %1295 = vmatpush1.msra.mxu0 0.0
    %1296 = vmatprep.subr.mxu0 0.0
    %1297 = vmatpush1.msra.mxu0 0.0
    %1298 = vmatprep.subr.mxu0 0.0
    %1299 = vmatpush1.msra.mxu0 0.0
    %1300 = vmatprep.subr.mxu0 0.0
    %1301 = vmatpush1.msra.mxu0 0.0
    %1302 = vmatprep.subr.mxu0 0.0
    %1303 = vmatpush1.msra.mxu0 0.0
    %1304 = vmatprep.subr.mxu0 0.0
    %1305 = vmatpush1.msra.mxu0 0.0
    %1306 = vmatprep.subr.mxu0 0.0
    %1307 = vmatpush1.msra.mxu0 0.0
    %1308 = vmatprep.subr.mxu0 0.0
    %1309 = vmatpush1.msra.mxu0 0.0
    %1310 = vmatprep.subr.mxu0 0.0
    %1311 = vmatpush1.msra.mxu0 0.0
    %1312 = vmatprep.subr.mxu0 0.0
    %1313 = vmatpush1.msra.mxu0 0.0
    %1314 = vmatprep.subr.mxu0 0.0
    %1315 = vmatpush1.msra.mxu0 0.0
    %1316 = vmatprep.mubr.f32.mxu0 0.0
    %1317 = vmatmul.mubr.f32.gmra.mrb[0].mxu0 %v1250
    %v1318 = vpop.f32.mrb[0].mxu0
    %v1319 = vadd.f32 0.0, %v1318
    %v1320 = vpop.f32.mrb[0].mxu0
    %1321 = vdwg.mxu0
    %1322 = vrot.lane.b32.xlu0 %v166, 64
    %v1323 = vpop.permute.xlu0 %1322
    %v1326 = vsel %vm171, %v863, 0
    %1328 = vmatprep.subr.mxu0 0.0
    %1329 = vmatpush1.msra.mxu0 %v1323
    %1330 = vmatprep.subr.mxu0 0.0
    %1331 = vmatpush1.msra.mxu0 0.0
    %1332 = vmatprep.subr.mxu0 0.0
    %1333 = vmatpush1.msra.mxu0 0.0
    %1334 = vmatprep.subr.mxu0 0.0
    %1335 = vmatpush1.msra.mxu0 0.0
    %1336 = vmatprep.subr.mxu0 0.0
    %1337 = vmatpush1.msra.mxu0 0.0
    %1338 = vmatprep.subr.mxu0 0.0
    %1339 = vmatpush1.msra.mxu0 0.0
    %1340 = vmatprep.subr.mxu0 0.0
    %1341 = vmatpush1.msra.mxu0 0.0
    %1342 = vmatprep.subr.mxu0 0.0
    %1343 = vmatpush1.msra.mxu0 0.0
    %1344 = vmatprep.subr.mxu0 0.0
    %1345 = vmatpush1.msra.mxu0 0.0
    %1346 = vmatprep.subr.mxu0 0.0
    %1347 = vmatpush1.msra.mxu0 0.0
    %1348 = vmatprep.subr.mxu0 0.0
    %1349 = vmatpush1.msra.mxu0 0.0
    %1350 = vmatprep.subr.mxu0 0.0
    %1351 = vmatpush1.msra.mxu0 0.0
    %1352 = vmatprep.subr.mxu0 0.0
    %1353 = vmatpush1.msra.mxu0 0.0
    %1354 = vmatprep.subr.mxu0 0.0
    %1355 = vmatpush1.msra.mxu0 0.0
    %1356 = vmatprep.subr.mxu0 0.0
    %1357 = vmatpush1.msra.mxu0 0.0
    %1358 = vmatprep.subr.mxu0 0.0
    %1359 = vmatpush1.msra.mxu0 0.0
    %1360 = vmatprep.subr.mxu0 0.0
    %1361 = vmatpush1.msra.mxu0 0.0
    %1362 = vmatprep.subr.mxu0 0.0
    %1363 = vmatpush1.msra.mxu0 0.0
    %1364 = vmatprep.subr.mxu0 0.0
    %1365 = vmatpush1.msra.mxu0 0.0
    %1366 = vmatprep.subr.mxu0 0.0
    %1367 = vmatpush1.msra.mxu0 0.0
    %1368 = vmatprep.subr.mxu0 0.0
    %1369 = vmatpush1.msra.mxu0 0.0
    %1370 = vmatprep.subr.mxu0 0.0
    %1371 = vmatpush1.msra.mxu0 0.0
    %1372 = vmatprep.subr.mxu0 0.0
    %1373 = vmatpush1.msra.mxu0 0.0
    %1374 = vmatprep.subr.mxu0 0.0
    %1375 = vmatpush1.msra.mxu0 0.0
    %1376 = vmatprep.subr.mxu0 0.0
    %1377 = vmatpush1.msra.mxu0 0.0
    %1378 = vmatprep.subr.mxu0 0.0
    %1379 = vmatpush1.msra.mxu0 0.0
    %1380 = vmatprep.subr.mxu0 0.0
    %1381 = vmatpush1.msra.mxu0 0.0
    %1382 = vmatprep.subr.mxu0 0.0
    %1383 = vmatpush1.msra.mxu0 0.0
    %1384 = vmatprep.subr.mxu0 0.0
    %1385 = vmatpush1.msra.mxu0 0.0
    %1386 = vmatprep.subr.mxu0 0.0
    %1387 = vmatpush1.msra.mxu0 0.0
    %1388 = vmatprep.subr.mxu0 0.0
    %1389 = vmatpush1.msra.mxu0 0.0
    %1390 = vmatprep.subr.mxu0 0.0
    %1391 = vmatpush1.msra.mxu0 0.0
    %1392 = vmatprep.mubr.f32.mxu0 0.0
    %1393 = vmatmul.mubr.f32.gmra.mrb[0].mxu0 %v1326
    %v1394 = vpop.f32.mrb[0].mxu0
    %v1395 = vadd.f32 0.0, %v1394
    %v1396 = vpop.f32.mrb[0].mxu0
    %1397 = vdwg.mxu0
    %1398 = vrot.lane.b32.xlu0 %v168, 64
    %v1399 = vpop.permute.xlu0 %1398
    %v1402 = vsel %vm171, %v865, 0
    %1404 = vmatprep.subr.mxu0 0.0
    %1405 = vmatpush1.msra.mxu0 %v1399
    %1406 = vmatprep.subr.mxu0 0.0
    %1407 = vmatpush1.msra.mxu0 0.0
    %1408 = vmatprep.subr.mxu0 0.0
    %1409 = vmatpush1.msra.mxu0 0.0
    %1410 = vmatprep.subr.mxu0 0.0
    %1411 = vmatpush1.msra.mxu0 0.0
    %1412 = vmatprep.subr.mxu0 0.0
    %1413 = vmatpush1.msra.mxu0 0.0
    %1414 = vmatprep.subr.mxu0 0.0
    %1415 = vmatpush1.msra.mxu0 0.0
    %1416 = vmatprep.subr.mxu0 0.0
    %1417 = vmatpush1.msra.mxu0 0.0
    %1418 = vmatprep.subr.mxu0 0.0
    %1419 = vmatpush1.msra.mxu0 0.0
    %1420 = vmatprep.subr.mxu0 0.0
    %1421 = vmatpush1.msra.mxu0 0.0
    %1422 = vmatprep.subr.mxu0 0.0
    %1423 = vmatpush1.msra.mxu0 0.0
    %1424 = vmatprep.subr.mxu0 0.0
    %1425 = vmatpush1.msra.mxu0 0.0
    %1426 = vmatprep.subr.mxu0 0.0
    %1427 = vmatpush1.msra.mxu0 0.0
    %1428 = vmatprep.subr.mxu0 0.0
    %1429 = vmatpush1.msra.mxu0 0.0
    %1430 = vmatprep.subr.mxu0 0.0
    %1431 = vmatpush1.msra.mxu0 0.0
    %1432 = vmatprep.subr.mxu0 0.0
    %1433 = vmatpush1.msra.mxu0 0.0
    %1434 = vmatprep.subr.mxu0 0.0
    %1435 = vmatpush1.msra.mxu0 0.0
    %1436 = vmatprep.subr.mxu0 0.0
    %1437 = vmatpush1.msra.mxu0 0.0
    %1438 = vmatprep.subr.mxu0 0.0
    %1439 = vmatpush1.msra.mxu0 0.0
    %1440 = vmatprep.subr.mxu0 0.0
    %1441 = vmatpush1.msra.mxu0 0.0
    %1442 = vmatprep.subr.mxu0 0.0
    %1443 = vmatpush1.msra.mxu0 0.0
    %1444 = vmatprep.subr.mxu0 0.0
    %1445 = vmatpush1.msra.mxu0 0.0
    %1446 = vmatprep.subr.mxu0 0.0
    %1447 = vmatpush1.msra.mxu0 0.0
    %1448 = vmatprep.subr.mxu0 0.0
    %1449 = vmatpush1.msra.mxu0 0.0
    %1450 = vmatprep.subr.mxu0 0.0
    %1451 = vmatpush1.msra.mxu0 0.0
    %1452 = vmatprep.subr.mxu0 0.0
    %1453 = vmatpush1.msra.mxu0 0.0
    %1454 = vmatprep.subr.mxu0 0.0
    %1455 = vmatpush1.msra.mxu0 0.0
    %1456 = vmatprep.subr.mxu0 0.0
    %1457 = vmatpush1.msra.mxu0 0.0
    %1458 = vmatprep.subr.mxu0 0.0
    %1459 = vmatpush1.msra.mxu0 0.0
    %1460 = vmatprep.subr.mxu0 0.0
    %1461 = vmatpush1.msra.mxu0 0.0
    %1462 = vmatprep.subr.mxu0 0.0
    %1463 = vmatpush1.msra.mxu0 0.0
    %1464 = vmatprep.subr.mxu0 0.0
    %1465 = vmatpush1.msra.mxu0 0.0
    %1466 = vmatprep.subr.mxu0 0.0
    %1467 = vmatpush1.msra.mxu0 0.0
    %1468 = vmatprep.mubr.f32.mxu0 0.0
    %1469 = vmatmul.mubr.f32.gmra.mrb[0].mxu0 %v1402
    %v1470 = vpop.f32.mrb[0].mxu0
    %v1471 = vadd.f32 0.0, %v1470
    %v1472 = vpop.f32.mrb[0].mxu0
    %1473 = vdwg.mxu0
    %v1474 = vld [vmem:[#allocation5 + $0x20] sm:$0xff]
    %v1475 = vld [vmem:[#allocation5 + $0x28] sm:$0xff]
    %v1477 = vsel %vm171, %v1091, 0
    %v1480 = vsel %vm171, %v1167, 0
    %1482 = vmatprep.subr.mxu0 0.0
    %1483 = vmatpush1.msra.mxu0 %v1475
    %1484 = vmatprep.subr.mxu0 0.0
    %1485 = vmatpush1.msra.mxu0 0.0
    %1486 = vmatprep.subr.mxu0 0.0
    %1487 = vmatpush1.msra.mxu0 0.0
    %1488 = vmatprep.subr.mxu0 0.0
    %1489 = vmatpush1.msra.mxu0 0.0
    %1490 = vmatprep.subr.mxu0 0.0
    %1491 = vmatpush1.msra.mxu0 0.0
    %1492 = vmatprep.subr.mxu0 0.0
    %1493 = vmatpush1.msra.mxu0 0.0
    %1494 = vmatprep.subr.mxu0 0.0
    %1495 = vmatpush1.msra.mxu0 0.0
    %1496 = vmatprep.subr.mxu0 0.0
    %1497 = vmatpush1.msra.mxu0 0.0
    %1498 = vmatprep.subr.mxu0 0.0
    %1499 = vmatpush1.msra.mxu0 0.0
    %1500 = vmatprep.subr.mxu0 0.0
    %1501 = vmatpush1.msra.mxu0 0.0
    %1502 = vmatprep.subr.mxu0 0.0
    %1503 = vmatpush1.msra.mxu0 0.0
    %1504 = vmatprep.subr.mxu0 0.0
    %1505 = vmatpush1.msra.mxu0 0.0
    %1506 = vmatprep.subr.mxu0 0.0
    %1507 = vmatpush1.msra.mxu0 0.0
    %1508 = vmatprep.subr.mxu0 0.0
    %1509 = vmatpush1.msra.mxu0 0.0
    %1510 = vmatprep.subr.mxu0 0.0
    %1511 = vmatpush1.msra.mxu0 0.0
    %1512 = vmatprep.subr.mxu0 0.0
    %1513 = vmatpush1.msra.mxu0 0.0
    %1514 = vmatprep.subr.mxu0 0.0
    %1515 = vmatpush1.msra.mxu0 0.0
    %1516 = vmatprep.subr.mxu0 0.0
    %1517 = vmatpush1.msra.mxu0 0.0
    %1518 = vmatprep.subr.mxu0 0.0
    %1519 = vmatpush1.msra.mxu0 0.0
    %1520 = vmatprep.subr.mxu0 0.0
    %1521 = vmatpush1.msra.mxu0 0.0
    %1522 = vmatprep.subr.mxu0 0.0
    %1523 = vmatpush1.msra.mxu0 0.0
    %1524 = vmatprep.subr.mxu0 0.0
    %1525 = vmatpush1.msra.mxu0 0.0
    %1526 = vmatprep.subr.mxu0 0.0
    %1527 = vmatpush1.msra.mxu0 0.0
    %1528 = vmatprep.subr.mxu0 0.0
    %1529 = vmatpush1.msra.mxu0 0.0
    %1530 = vmatprep.subr.mxu0 0.0
    %1531 = vmatpush1.msra.mxu0 0.0
    %1532 = vmatprep.subr.mxu0 0.0
    %1533 = vmatpush1.msra.mxu0 0.0
    %1534 = vmatprep.subr.mxu0 0.0
    %1535 = vmatpush1.msra.mxu0 0.0
    %1536 = vmatprep.subr.mxu0 0.0
    %1537 = vmatpush1.msra.mxu0 0.0
    %1538 = vmatprep.subr.mxu0 0.0
    %1539 = vmatpush1.msra.mxu0 0.0
    %1540 = vmatprep.subr.mxu0 0.0
    %1541 = vmatpush1.msra.mxu0 0.0
    %1542 = vmatprep.subr.mxu0 0.0
    %1543 = vmatpush1.msra.mxu0 0.0
    %1544 = vmatprep.subr.mxu0 0.0
    %1545 = vmatpush1.msra.mxu0 0.0
    %1546 = vmatprep.mubr.f32.mxu0 0.0
    %1547 = vmatmul.mubr.f32.gmra.mrb[0].mxu0 %v1477
    %v1548 = vpop.f32.mrb[0].mxu0
    %v1549 = vadd.f32 0.0, %v1548
    %v1550 = vpop.f32.mrb[0].mxu0
    %1551 = vmatprep.mubr.f32.mxu0 0.0
    %1552 = vmatmul.mubr.f32.gmra.mrb[0].mxu0 %v1480
    %v1553 = vpop.f32.mrb[0].mxu0
    %v1554 = vadd.f32 0.0, %v1553
    %v1555 = vpop.f32.mrb[0].mxu0
    %1556 = vdwg.mxu0
    %v1558 = vsel %vm171, %v939, 0
    %v1561 = vsel %vm171, %v1015, 0
    %1563 = vmatprep.subr.mxu0 0.0
    %1564 = vmatpush1.msra.mxu0 %v1474
    %1565 = vmatprep.subr.mxu0 0.0
    %1566 = vmatpush1.msra.mxu0 0.0
    %1567 = vmatprep.subr.mxu0 0.0
    %1568 = vmatpush1.msra.mxu0 0.0
    %1569 = vmatprep.subr.mxu0 0.0
    %1570 = vmatpush1.msra.mxu0 0.0
    %1571 = vmatprep.subr.mxu0 0.0
    %1572 = vmatpush1.msra.mxu0 0.0
    %1573 = vmatprep.subr.mxu0 0.0
    %1574 = vmatpush1.msra.mxu0 0.0
    %1575 = vmatprep.subr.mxu0 0.0
    %1576 = vmatpush1.msra.mxu0 0.0
    %1577 = vmatprep.subr.mxu0 0.0
    %1578 = vmatpush1.msra.mxu0 0.0
    %1579 = vmatprep.subr.mxu0 0.0
    %1580 = vmatpush1.msra.mxu0 0.0
    %1581 = vmatprep.subr.mxu0 0.0
    %1582 = vmatpush1.msra.mxu0 0.0
    %1583 = vmatprep.subr.mxu0 0.0
    %1584 = vmatpush1.msra.mxu0 0.0
    %1585 = vmatprep.subr.mxu0 0.0
    %1586 = vmatpush1.msra.mxu0 0.0
    %1587 = vmatprep.subr.mxu0 0.0
    %1588 = vmatpush1.msra.mxu0 0.0
    %1589 = vmatprep.subr.mxu0 0.0
    %1590 = vmatpush1.msra.mxu0 0.0
    %1591 = vmatprep.subr.mxu0 0.0
    %1592 = vmatpush1.msra.mxu0 0.0
    %1593 = vmatprep.subr.mxu0 0.0
    %1594 = vmatpush1.msra.mxu0 0.0
    %1595 = vmatprep.subr.mxu0 0.0
    %1596 = vmatpush1.msra.mxu0 0.0
    %1597 = vmatprep.subr.mxu0 0.0
    %1598 = vmatpush1.msra.mxu0 0.0
    %1599 = vmatprep.subr.mxu0 0.0
    %1600 = vmatpush1.msra.mxu0 0.0
    %1601 = vmatprep.subr.mxu0 0.0
    %1602 = vmatpush1.msra.mxu0 0.0
    %1603 = vmatprep.subr.mxu0 0.0
    %1604 = vmatpush1.msra.mxu0 0.0
    %1605 = vmatprep.subr.mxu0 0.0
    %1606 = vmatpush1.msra.mxu0 0.0
    %1607 = vmatprep.subr.mxu0 0.0
    %1608 = vmatpush1.msra.mxu0 0.0
    %1609 = vmatprep.subr.mxu0 0.0
    %1610 = vmatpush1.msra.mxu0 0.0
    %1611 = vmatprep.subr.mxu0 0.0
    %1612 = vmatpush1.msra.mxu0 0.0
    %1613 = vmatprep.subr.mxu0 0.0
    %1614 = vmatpush1.msra.mxu0 0.0
    %1615 = vmatprep.subr.mxu0 0.0
    %1616 = vmatpush1.msra.mxu0 0.0
    %1617 = vmatprep.subr.mxu0 0.0
    %1618 = vmatpush1.msra.mxu0 0.0
    %1619 = vmatprep.subr.mxu0 0.0
    %1620 = vmatpush1.msra.mxu0 0.0
    %1621 = vmatprep.subr.mxu0 0.0
    %1622 = vmatpush1.msra.mxu0 0.0
    %1623 = vmatprep.subr.mxu0 0.0
    %1624 = vmatpush1.msra.mxu0 0.0
    %1625 = vmatprep.subr.mxu0 0.0
    %1626 = vmatpush1.msra.mxu0 0.0
    %1627 = vmatprep.mubr.f32.mxu0 0.0
    %1628 = vmatmul.mubr.f32.gmra.mrb[0].mxu0 %v1558
    %v1629 = vpop.f32.mrb[0].mxu0
    %v1630 = vadd.f32 %v1549, %v1629
    %v1631 = vpop.f32.mrb[0].mxu0
    %1632 = vmatprep.mubr.f32.mxu0 0.0
    %1633 = vmatmul.mubr.f32.gmra.mrb[0].mxu0 %v1561
    %v1634 = vpop.f32.mrb[0].mxu0
    %v1635 = vadd.f32 %v1554, %v1634
    %v1636 = vpop.f32.mrb[0].mxu0
    %1637 = vdwg.mxu0
    %v1638 = vld [vmem:[#allocation5 + $0x30] sm:$0xff]
    %v1640 = vsel %vm171, %v1243, 0
    %v1643 = vsel %vm171, %v1319, 0
    %1645 = vmatprep.subr.mxu0 0.0
    %1646 = vmatpush1.msra.mxu0 %v1638
    %1647 = vmatprep.subr.mxu0 0.0
    %1648 = vmatpush1.msra.mxu0 0.0
    %1649 = vmatprep.subr.mxu0 0.0
    %1650 = vmatpush1.msra.mxu0 0.0
    %1651 = vmatprep.subr.mxu0 0.0
    %1652 = vmatpush1.msra.mxu0 0.0
    %1653 = vmatprep.subr.mxu0 0.0
    %1654 = vmatpush1.msra.mxu0 0.0
    %1655 = vmatprep.subr.mxu0 0.0
    %1656 = vmatpush1.msra.mxu0 0.0
    %1657 = vmatprep.subr.mxu0 0.0
    %1658 = vmatpush1.msra.mxu0 0.0
    %1659 = vmatprep.subr.mxu0 0.0
    %1660 = vmatpush1.msra.mxu0 0.0
    %1661 = vmatprep.subr.mxu0 0.0
    %1662 = vmatpush1.msra.mxu0 0.0
    %1663 = vmatprep.subr.mxu0 0.0
    %1664 = vmatpush1.msra.mxu0 0.0
    %1665 = vmatprep.subr.mxu0 0.0
    %1666 = vmatpush1.msra.mxu0 0.0
    %1667 = vmatprep.subr.mxu0 0.0
    %1668 = vmatpush1.msra.mxu0 0.0
    %1669 = vmatprep.subr.mxu0 0.0
    %1670 = vmatpush1.msra.mxu0 0.0
    %1671 = vmatprep.subr.mxu0 0.0
    %1672 = vmatpush1.msra.mxu0 0.0
    %1673 = vmatprep.subr.mxu0 0.0
    %1674 = vmatpush1.msra.mxu0 0.0
    %1675 = vmatprep.subr.mxu0 0.0
    %1676 = vmatpush1.msra.mxu0 0.0
    %1677 = vmatprep.subr.mxu0 0.0
    %1678 = vmatpush1.msra.mxu0 0.0
    %1679 = vmatprep.subr.mxu0 0.0
    %1680 = vmatpush1.msra.mxu0 0.0
    %1681 = vmatprep.subr.mxu0 0.0
    %1682 = vmatpush1.msra.mxu0 0.0
    %1683 = vmatprep.subr.mxu0 0.0
    %1684 = vmatpush1.msra.mxu0 0.0
    %1685 = vmatprep.subr.mxu0 0.0
    %1686 = vmatpush1.msra.mxu0 0.0
    %1687 = vmatprep.subr.mxu0 0.0
    %1688 = vmatpush1.msra.mxu0 0.0
    %1689 = vmatprep.subr.mxu0 0.0
    %1690 = vmatpush1.msra.mxu0 0.0
    %1691 = vmatprep.subr.mxu0 0.0
    %1692 = vmatpush1.msra.mxu0 0.0
    %1693 = vmatprep.subr.mxu0 0.0
    %1694 = vmatpush1.msra.mxu0 0.0
    %1695 = vmatprep.subr.mxu0 0.0
    %1696 = vmatpush1.msra.mxu0 0.0
    %1697 = vmatprep.subr.mxu0 0.0
    %1698 = vmatpush1.msra.mxu0 0.0
    %1699 = vmatprep.subr.mxu0 0.0
    %1700 = vmatpush1.msra.mxu0 0.0
    %1701 = vmatprep.subr.mxu0 0.0
    %1702 = vmatpush1.msra.mxu0 0.0
    %1703 = vmatprep.subr.mxu0 0.0
    %1704 = vmatpush1.msra.mxu0 0.0
    %1705 = vmatprep.subr.mxu0 0.0
    %1706 = vmatpush1.msra.mxu0 0.0
    %1707 = vmatprep.subr.mxu0 0.0
    %1708 = vmatpush1.msra.mxu0 0.0
    %1709 = vmatprep.mubr.f32.mxu0 0.0
    %1710 = vmatmul.mubr.f32.gmra.mrb[0].mxu0 %v1640
    %v1711 = vpop.f32.mrb[0].mxu0
    %v1712 = vadd.f32 0.0, %v1711
    %v1713 = vpop.f32.mrb[0].mxu0
    %1714 = vmatprep.mubr.f32.mxu0 0.0
    %1715 = vmatmul.mubr.f32.gmra.mrb[0].mxu0 %v1643
    %v1716 = vpop.f32.mrb[0].mxu0
    %v1717 = vadd.f32 0.0, %v1716
    %v1718 = vpop.f32.mrb[0].mxu0
    %1719 = vdwg.mxu0
    %v1720 = vadd.f32 %v1630, %v1712
    %v1721 = vadd.f32 %v1635, %v1717
    %v1722 = vld [vmem:[#allocation5 + $0x38] sm:$0xff]
    %v1724 = vsel %vm171, %v1395, 0
    %v1727 = vsel %vm171, %v1471, 0
    %1729 = vmatprep.subr.mxu0 0.0
    %1730 = vmatpush1.msra.mxu0 %v1722
    %1731 = vmatprep.subr.mxu0 0.0
    %1732 = vmatpush1.msra.mxu0 0.0
    %1733 = vmatprep.subr.mxu0 0.0
    %1734 = vmatpush1.msra.mxu0 0.0
    %1735 = vmatprep.subr.mxu0 0.0
    %1736 = vmatpush1.msra.mxu0 0.0
    %1737 = vmatprep.subr.mxu0 0.0
    %1738 = vmatpush1.msra.mxu0 0.0
    %1739 = vmatprep.subr.mxu0 0.0
    %1740 = vmatpush1.msra.mxu0 0.0
    %1741 = vmatprep.subr.mxu0 0.0
    %1742 = vmatpush1.msra.mxu0 0.0
    %1743 = vmatprep.subr.mxu0 0.0
    %1744 = vmatpush1.msra.mxu0 0.0
    %1745 = vmatprep.subr.mxu0 0.0
    %1746 = vmatpush1.msra.mxu0 0.0
    %1747 = vmatprep.subr.mxu0 0.0
    %1748 = vmatpush1.msra.mxu0 0.0
    %1749 = vmatprep.subr.mxu0 0.0
    %1750 = vmatpush1.msra.mxu0 0.0
    %1751 = vmatprep.subr.mxu0 0.0
    %1752 = vmatpush1.msra.mxu0 0.0
    %1753 = vmatprep.subr.mxu0 0.0
    %1754 = vmatpush1.msra.mxu0 0.0
    %1755 = vmatprep.subr.mxu0 0.0
    %1756 = vmatpush1.msra.mxu0 0.0
    %1757 = vmatprep.subr.mxu0 0.0
    %1758 = vmatpush1.msra.mxu0 0.0
    %1759 = vmatprep.subr.mxu0 0.0
    %1760 = vmatpush1.msra.mxu0 0.0
    %1761 = vmatprep.subr.mxu0 0.0
    %1762 = vmatpush1.msra.mxu0 0.0
    %1763 = vmatprep.subr.mxu0 0.0
    %1764 = vmatpush1.msra.mxu0 0.0
    %1765 = vmatprep.subr.mxu0 0.0
    %1766 = vmatpush1.msra.mxu0 0.0
    %1767 = vmatprep.subr.mxu0 0.0
    %1768 = vmatpush1.msra.mxu0 0.0
    %1769 = vmatprep.subr.mxu0 0.0
    %1770 = vmatpush1.msra.mxu0 0.0
    %1771 = vmatprep.subr.mxu0 0.0
    %1772 = vmatpush1.msra.mxu0 0.0
    %1773 = vmatprep.subr.mxu0 0.0
    %1774 = vmatpush1.msra.mxu0 0.0
    %1775 = vmatprep.subr.mxu0 0.0
    %1776 = vmatpush1.msra.mxu0 0.0
    %1777 = vmatprep.subr.mxu0 0.0
    %1778 = vmatpush1.msra.mxu0 0.0
    %1779 = vmatprep.subr.mxu0 0.0
    %1780 = vmatpush1.msra.mxu0 0.0
    %1781 = vmatprep.subr.mxu0 0.0
    %1782 = vmatpush1.msra.mxu0 0.0
    %1783 = vmatprep.subr.mxu0 0.0
    %1784 = vmatpush1.msra.mxu0 0.0
    %1785 = vmatprep.subr.mxu0 0.0
    %1786 = vmatpush1.msra.mxu0 0.0
    %1787 = vmatprep.subr.mxu0 0.0
    %1788 = vmatpush1.msra.mxu0 0.0
    %1789 = vmatprep.subr.mxu0 0.0
    %1790 = vmatpush1.msra.mxu0 0.0
    %1791 = vmatprep.subr.mxu0 0.0
    %1792 = vmatpush1.msra.mxu0 0.0
    %1793 = vmatprep.mubr.f32.mxu0 0.0
    %1794 = vmatmul.mubr.f32.gmra.mrb[0].mxu0 %v1724
    %v1795 = vpop.f32.mrb[0].mxu0
    %v1796 = vadd.f32 0.0, %v1795
    %v1797 = vpop.f32.mrb[0].mxu0
    %1798 = vmatprep.mubr.f32.mxu0 0.0
    %1799 = vmatmul.mubr.f32.gmra.mrb[0].mxu0 %v1727
    %v1800 = vpop.f32.mrb[0].mxu0
    %v1801 = vadd.f32 0.0, %v1800
    %v1802 = vpop.f32.mrb[0].mxu0
    %1803 = vdwg.mxu0
    %v1804 = vadd.f32 %v1720, %v1796
    %v1805 = vadd.f32 %v1721, %v1801
    %v1806 = vlaneseq
    %v1807 = vshrl.u32 %v1806, 7
    %v1808 = vsub.s32 0, %v1807
    %v1809 = vrot.slane %v62, %v1808
    %v1810 = vadd.f32 %v1804, %v1809
    %v1811 = vadd.f32 %v1805, %v1809
    %v1812 = vadd.f32 %v1810, %v43
    %v1813 = vadd.f32 %v1811, %v44
    %v1814 = vsel %vm73, %v1812, 0.0
    %1815 = vadd.xlane.f32.xlu0 %v1814
    %v1816 = vpop.xlane.xlu0 %1815
    %v1817 = vsel %vm73, %v1813, 0.0
    %1818 = vadd.xlane.f32.xlu0 %v1817
    %v1819 = vpop.xlane.xlu0 %1818
    %v1820 = vrcp.pop 32.0
    %v1821 = vmul.f32 %v1816, %v1820
    %v1822 = vmul.f32 %v1819, %v1820
    %v1823 = vsub.f32 %v1812, %v1821
    %v1824 = vsub.f32 %v1813, %v1822
    %v1825 = vmul.f32 %v1823, %v1823
    %v1826 = vmul.f32 %v1824, %v1824
    %v1827 = vsel %vm73, %v1825, 0.0
    %1828 = vadd.xlane.f32.xlu0 %v1827
    %v1829 = vpop.xlane.xlu0 %1828
    %v1830 = vsel %vm73, %v1826, 0.0
    %1831 = vadd.xlane.f32.xlu0 %v1830
    %v1832 = vpop.xlane.xlu0 %1831
    %v1833 = vmul.f32 %v1829, %v1820
    %v1834 = vmul.f32 %v1832, %v1820
    %v1835 = vadd.f32 %v1833, 1e-05
    %v1836 = vadd.f32 %v1834, 1e-05
    %v1837 = vrsqrt.pop %v1835
    %v1838 = vrsqrt.pop %v1836
    %v1839 = vmul.f32 %v1823, %v1837
    %v1840 = vmul.f32 %v1824, %v1838
    %v1841 = vlaneseq
    %v1842 = vshrl.u32 %v1841, 7
    %v1843 = vsub.s32 0, %v1842
    %v1844 = vrot.slane %v65, %v1843
    %v1845 = vmul.f32 %v1839, %v1844
    %v1846 = vmul.f32 %v1840, %v1844
    %v1847 = vlaneseq
    %v1848 = vshrl.u32 %v1847, 7
    %v1849 = vsub.s32 0, %v1848
    %v1850 = vrot.slane %v66, %v1849
    %v1851 = vadd.f32 %v1845, %v1850
    %v1852 = vadd.f32 %v1846, %v1850
    %v1853 = vlaneseq
    %v1854 = vshrl.u32 %v1853, 7
    %v1855 = vsub.s32 0, %v1854
    %v1856 = vrot.slane %v63, %v1855
    %v1858 = vsel %vm73, %v1851, 0
    %v1861 = vsel %vm73, %v1852, 0
    %1863 = vmatprep.subr.mxu0 0.0
    %1864 = vmatpush1.msra.mxu0 %v49
    %1865 = vmatprep.subr.mxu0 0.0
    %1866 = vmatpush1.msra.mxu0 %v50
    %1867 = vmatprep.subr.mxu0 0.0
    %1868 = vmatpush1.msra.mxu0 %v51
    %1869 = vmatprep.subr.mxu0 0.0
    %1870 = vmatpush1.msra.mxu0 %v52
    %1871 = vmatprep.subr.mxu0 0.0
    %1872 = vmatpush1.msra.mxu0 0.0
    %1873 = vmatprep.subr.mxu0 0.0
    %1874 = vmatpush1.msra.mxu0 0.0
    %1875 = vmatprep.subr.mxu0 0.0
    %1876 = vmatpush1.msra.mxu0 0.0
    %1877 = vmatprep.subr.mxu0 0.0
    %1878 = vmatpush1.msra.mxu0 0.0
    %1879 = vmatprep.subr.mxu0 0.0
    %1880 = vmatpush1.msra.mxu0 0.0
    %1881 = vmatprep.subr.mxu0 0.0
    %1882 = vmatpush1.msra.mxu0 0.0
    %1883 = vmatprep.subr.mxu0 0.0
    %1884 = vmatpush1.msra.mxu0 0.0
    %1885 = vmatprep.subr.mxu0 0.0
    %1886 = vmatpush1.msra.mxu0 0.0
    %1887 = vmatprep.subr.mxu0 0.0
    %1888 = vmatpush1.msra.mxu0 0.0
    %1889 = vmatprep.subr.mxu0 0.0
    %1890 = vmatpush1.msra.mxu0 0.0
    %1891 = vmatprep.subr.mxu0 0.0
    %1892 = vmatpush1.msra.mxu0 0.0
    %1893 = vmatprep.subr.mxu0 0.0
    %1894 = vmatpush1.msra.mxu0 0.0
    %1895 = vmatprep.subr.mxu0 0.0
    %1896 = vmatpush1.msra.mxu0 0.0
    %1897 = vmatprep.subr.mxu0 0.0
    %1898 = vmatpush1.msra.mxu0 0.0
    %1899 = vmatprep.subr.mxu0 0.0
    %1900 = vmatpush1.msra.mxu0 0.0
    %1901 = vmatprep.subr.mxu0 0.0
    %1902 = vmatpush1.msra.mxu0 0.0
    %1903 = vmatprep.subr.mxu0 0.0
    %1904 = vmatpush1.msra.mxu0 0.0
    %1905 = vmatprep.subr.mxu0 0.0
    %1906 = vmatpush1.msra.mxu0 0.0
    %1907 = vmatprep.subr.mxu0 0.0
    %1908 = vmatpush1.msra.mxu0 0.0
    %1909 = vmatprep.subr.mxu0 0.0
    %1910 = vmatpush1.msra.mxu0 0.0
    %1911 = vmatprep.subr.mxu0 0.0
    %1912 = vmatpush1.msra.mxu0 0.0
    %1913 = vmatprep.subr.mxu0 0.0
    %1914 = vmatpush1.msra.mxu0 0.0
    %1915 = vmatprep.subr.mxu0 0.0
    %1916 = vmatpush1.msra.mxu0 0.0
    %1917 = vmatprep.subr.mxu0 0.0
    %1918 = vmatpush1.msra.mxu0 0.0
    %1919 = vmatprep.subr.mxu0 0.0
    %1920 = vmatpush1.msra.mxu0 0.0
    %1921 = vmatprep.subr.mxu0 0.0
    %1922 = vmatpush1.msra.mxu0 0.0
    %1923 = vmatprep.subr.mxu0 0.0
    %1924 = vmatpush1.msra.mxu0 0.0
    %1925 = vmatprep.subr.mxu0 0.0
    %1926 = vmatpush1.msra.mxu0 0.0
    %1927 = vmatprep.mubr.f32.mxu0 0.0
    %1928 = vmatmul.mubr.f32.gmra.mrb[0].mxu0 %v1858
    %v1929 = vpop.f32.mrb[0].mxu0
    %v1930 = vadd.f32 %v1856, %v1929
    %v1931 = vpop.f32.mrb[0].mxu0
    %1932 = vmatprep.mubr.f32.mxu0 0.0
    %1933 = vmatmul.mubr.f32.gmra.mrb[0].mxu0 %v1861
    %v1934 = vpop.f32.mrb[0].mxu0
    %v1935 = vadd.f32 %v1856, %v1934
    %v1936 = vpop.f32.mrb[0].mxu0
    %1937 = vdwg.mxu0
    %v1938 = vmax.f32 %v1930, 0.0
    %v1939 = vmax.f32 %v1935, 0.0
    %v1940 = vlaneseq
    %v1941 = vshrl.u32 %v1940, 7
    %v1942 = vsub.s32 0, %v1941
    %v1943 = vrot.slane %v64, %v1942
    %vm1944 = vcmask 523264
    %v1946 = vsel %vm1944, %v1938, 0
    %v1949 = vsel %vm1944, %v1939, 0
    %1951 = vmatprep.subr.mxu0 0.0
    %1952 = vmatpush1.msra.mxu0 %v53
    %1953 = vmatprep.subr.mxu0 0.0
    %1954 = vmatpush1.msra.mxu0 %v54
    %1955 = vmatprep.subr.mxu0 0.0
    %1956 = vmatpush1.msra.mxu0 %v55
    %1957 = vmatprep.subr.mxu0 0.0
    %1958 = vmatpush1.msra.mxu0 %v56
    %1959 = vmatprep.subr.mxu0 0.0
    %1960 = vmatpush1.msra.mxu0 %v57
    %1961 = vmatprep.subr.mxu0 0.0
    %1962 = vmatpush1.msra.mxu0 %v58
    %1963 = vmatprep.subr.mxu0 0.0
    %1964 = vmatpush1.msra.mxu0 %v59
    %1965 = vmatprep.subr.mxu0 0.0
    %1966 = vmatpush1.msra.mxu0 %v60
    %1967 = vmatprep.subr.mxu0 0.0
    %1968 = vmatpush1.msra.mxu0 0.0
    %1969 = vmatprep.subr.mxu0 0.0
    %1970 = vmatpush1.msra.mxu0 0.0
    %1971 = vmatprep.subr.mxu0 0.0
    %1972 = vmatpush1.msra.mxu0 0.0
    %1973 = vmatprep.subr.mxu0 0.0
    %1974 = vmatpush1.msra.mxu0 0.0
    %1975 = vmatprep.subr.mxu0 0.0
    %1976 = vmatpush1.msra.mxu0 0.0
    %1977 = vmatprep.subr.mxu0 0.0
    %1978 = vmatpush1.msra.mxu0 0.0
    %1979 = vmatprep.subr.mxu0 0.0
    %1980 = vmatpush1.msra.mxu0 0.0
    %1981 = vmatprep.subr.mxu0 0.0
    %1982 = vmatpush1.msra.mxu0 0.0
    %1983 = vmatprep.subr.mxu0 0.0
    %1984 = vmatpush1.msra.mxu0 0.0
    %1985 = vmatprep.subr.mxu0 0.0
    %1986 = vmatpush1.msra.mxu0 0.0
    %1987 = vmatprep.subr.mxu0 0.0
    %1988 = vmatpush1.msra.mxu0 0.0
    %1989 = vmatprep.subr.mxu0 0.0
    %1990 = vmatpush1.msra.mxu0 0.0
    %1991 = vmatprep.subr.mxu0 0.0
    %1992 = vmatpush1.msra.mxu0 0.0
    %1993 = vmatprep.subr.mxu0 0.0
    %1994 = vmatpush1.msra.mxu0 0.0
    %1995 = vmatprep.subr.mxu0 0.0
    %1996 = vmatpush1.msra.mxu0 0.0
    %1997 = vmatprep.subr.mxu0 0.0
    %1998 = vmatpush1.msra.mxu0 0.0
    %1999 = vmatprep.subr.mxu0 0.0
    %2000 = vmatpush1.msra.mxu0 0.0
    %2001 = vmatprep.subr.mxu0 0.0
    %2002 = vmatpush1.msra.mxu0 0.0
    %2003 = vmatprep.subr.mxu0 0.0
    %2004 = vmatpush1.msra.mxu0 0.0
    %2005 = vmatprep.subr.mxu0 0.0
    %2006 = vmatpush1.msra.mxu0 0.0
    %2007 = vmatprep.subr.mxu0 0.0
    %2008 = vmatpush1.msra.mxu0 0.0
    %2009 = vmatprep.subr.mxu0 0.0
    %2010 = vmatpush1.msra.mxu0 0.0
    %2011 = vmatprep.subr.mxu0 0.0
    %2012 = vmatpush1.msra.mxu0 0.0
    %2013 = vmatprep.subr.mxu0 0.0
    %2014 = vmatpush1.msra.mxu0 0.0
    %2015 = vmatprep.mubr.f32.mxu0 0.0
    %2016 = vmatmul.mubr.f32.gmra.mrb[0].mxu0 %v1946
    %v2017 = vpop.f32.mrb[0].mxu0
    %v2018 = vadd.f32 %v1943, %v2017
    %v2019 = vpop.f32.mrb[0].mxu0
    %2020 = vmatprep.mubr.f32.mxu0 0.0
    %2021 = vmatmul.mubr.f32.gmra.mrb[0].mxu0 %v1949
    %v2022 = vpop.f32.mrb[0].mxu0
    %v2023 = vadd.f32 %v1943, %v2022
    %v2024 = vpop.f32.mrb[0].mxu0
    %2025 = vdwg.mxu0
    %v2026 = vadd.f32 %v2018, %v1851
    %v2027 = vadd.f32 %v2023, %v1852
    %v2028 = vsel %vm73, %v2026, 0.0
    %2029 = vadd.xlane.f32.xlu0 %v2028
    %v2030 = vpop.xlane.xlu0 %2029
    %v2031 = vsel %vm73, %v2027, 0.0
    %2032 = vadd.xlane.f32.xlu0 %v2031
    %v2033 = vpop.xlane.xlu0 %2032
    %v2034 = vmul.f32 %v2030, %v1820
    %v2035 = vmul.f32 %v2033, %v1820
    %v2036 = vsub.f32 %v2026, %v2034
    %v2037 = vsub.f32 %v2027, %v2035
    %v2038 = vmul.f32 %v2036, %v2036
    %v2039 = vmul.f32 %v2037, %v2037
    %v2040 = vsel %vm73, %v2038, 0.0
    %2041 = vadd.xlane.f32.xlu0 %v2040
    %v2042 = vpop.xlane.xlu0 %2041
    %v2043 = vsel %vm73, %v2039, 0.0
    %2044 = vadd.xlane.f32.xlu0 %v2043
    %v2045 = vpop.xlane.xlu0 %2044
    %v2046 = vmul.f32 %v2042, %v1820
    %v2047 = vmul.f32 %v2045, %v1820
    %v2048 = vadd.f32 %v2046, 1e-05
    %v2049 = vadd.f32 %v2047, 1e-05
    %v2050 = vrsqrt.pop %v2048
    %v2051 = vrsqrt.pop %v2049
    %v2052 = vmul.f32 %v2036, %v2050
    %v2053 = vmul.f32 %v2037, %v2051
    %v2054 = vlaneseq
    %v2055 = vshrl.u32 %v2054, 7
    %v2056 = vsub.s32 0, %v2055
    %v2057 = vrot.slane %v67, %v2056
    %v2058 = vmul.f32 %v2052, %v2057
    %v2059 = vmul.f32 %v2053, %v2057
    %v2060 = vlaneseq
    %v2061 = vshrl.u32 %v2060, 7
    %v2062 = vsub.s32 0, %v2061
    %v2063 = vrot.slane %v68, %v2062
    %v2064 = vadd.f32 %v2058, %v2063
    %v2065 = vadd.f32 %v2059, %v2063
    %2066 = vst.msk [vmem:[#allocation7] sm:$0xff] %vm73, %v2064
    %2067 = vst.msk [vmem:[#allocation7 + $0x8] sm:$0xff] %vm73, %v2065
    // Predicated region
    $region22: #{encoder_layer.1} parent=1 // pred_check
      _
    $region23: #{encoder_layer.1} parent=1 // pred_check_branch
      %2069 = sbr.rel (0) target = $region25
    $region24: #{encoder_layer.1} parent=1 // pred_region
      %s2071 = ssub.s32 256, 256
      %2072 = vsyncadd [#allocation4], %s2071
      %s2073 = sshll.u32 [#allocation7], 4
      %s2074 = int_to_ptr.vmem [resolvable:$true] %s2073
      %2079 = dma.vmem_to_hbm [thread:$0]  %s2074, 256, %s3, [#allocation4], 128, 128, 8
    $region25: #{encoder_layer.1} parent=1 // pred_fallthru
      _
    // Predicated region
    $region26: #{encoder_layer.1} parent=1 // pred_check
      _
    $region27: #{encoder_layer.1} parent=1 // pred_check_branch
      %2081 = sbr.rel (0) target = $region29
    $region28: #{encoder_layer.1} parent=1 // pred_region
      %2082 = dma.done [#allocation4], 256
    $region29: #{encoder_layer.1} parent=1 // pred_fallthru
      _
    %2083 = vsyncpa [#allocation3], 1
    %2084 = vsyncpa [#allocation6], 1
    %2085 = vsyncpa [#allocation4], 1

</llo_original>
